<compile_context>
chip_gen: v6e
topology: v6e:2x2x1
jax: 0.10.0
libtpu: 0.0.40
codegen_flags: <defaults>
</compile_context>

<pallas_src>
import functools

import jax
import jax.numpy as jnp
from jax import lax
from jax.experimental import pallas as pl
from jax.experimental.pallas import tpu as pltpu


# ------------------------- hyper-parameters (opt.*) -------------------------
POS_WEIGHT = 2.0      # opt.loss_multisimilarity_pos_weight
NEG_WEIGHT = 40.0     # opt.loss_multisimilarity_neg_weight
MARGIN = 0.1          # opt.loss_multisimilarity_margin
BETA_INIT = 0.5       # opt.loss_multisimilarity_beta
EPSILON = 1e-5

_LANE = 128


def _ms_loss_kernel(x_full_ref, lcol_ref, lrow_ref, beta_ref, o_ref,
                    *, pos_w, neg_w, margin, n_valid, tm):
    """One tile of TM anchor rows vs. the full (resident) batch.

    x_full_ref: (B_pad, D) f32  resident embeddings (anchor tile sliced in-kernel)
    lcol_ref:   (B_pad, 1) i32  resident labels, column layout (padded rows = -1)
    lrow_ref:   (1, B_pad) i32  resident labels, row layout    (padded cols = -1)
    beta_ref:   (B_pad, 1) f32  resident beta[labels[i]] per row
    o_ref:      (8, 128)   f32  tile partial loss, replicated (lane-dense store)
    """
    pid = pl.program_id(0)
    bp = x_full_ref.shape[0]
    row_base = pl.multiple_of(pid * tm, tm)

    # Anchor rows: 128-aligned sublane slice of the resident matrix
    # (no duplicate x input / second HBM stream).
    x_tile = x_full_ref[pl.ds(row_base, tm), :]               # (TM, D)

    # MXU: contract over D on both operands, no explicit transpose.
    # TODO(synk): cast operands to bf16 for the MXU when D is large (keep f32 acc).
    sim = lax.dot_general(
        x_tile, x_full_ref[...],
        dimension_numbers=(((1,), (1,)), ((), ())),
        preferred_element_type=jnp.float32)                   # (TM, Bp)

    lcol = lcol_ref[pl.ds(row_base, tm), :]                   # (TM, 1)
    lrow = lrow_ref[...]                                      # (1, Bp)
    beta = beta_ref[pl.ds(row_base, tm), :]                   # (TM, 1)

    same = lcol == lrow                                       # (TM, Bp)

    # Single full-size iota (columns); row ids stay (TM, 1) and broadcast.
    col_ids = lax.broadcasted_iota(jnp.int32, (tm, bp), 1)
    row_ids = lax.broadcasted_iota(jnp.int32, (tm, 1), 0) + row_base  # (TM, 1)

    # pos_pair_: same label, not self, sim < 1 - eps
    pos_mask = jnp.logical_and(jnp.logical_and(same, col_ids != row_ids),
                               sim < (1.0 - EPSILON))
    # neg_pair_: different label, real (non-padded) column
    neg_mask = jnp.logical_and(jnp.logical_not(same), col_ids < n_valid)

    big = jnp.float32(1e30)
    min_pos = jnp.min(jnp.where(pos_mask, sim, big), axis=1, keepdims=True)   # (TM,1)
    max_neg = jnp.max(jnp.where(neg_mask, sim, -big), axis=1, keepdims=True)  # (TM,1)

    # max_min sampling
    sel_neg = jnp.logical_and(neg_mask, (sim + margin) > min_pos)
    sel_pos = jnp.logical_and(pos_mask, (sim - margin) < max_neg)

    # ONE fused exponential (sel_pos / sel_neg are disjoint); beta kept inside
    # the exponent exactly as in the reference (no overflow-prone hoisting).
    scale = jnp.where(sel_pos, -pos_w, neg_w)                 # (TM, Bp)
    e = jnp.exp(scale * (sim - beta))                         # single EUP pass
    pos_sum = jnp.sum(jnp.where(sel_pos, e, 0.0), axis=1, keepdims=True)  # (TM,1)
    neg_sum = jnp.sum(jnp.where(sel_neg, e, 0.0), axis=1, keepdims=True)  # (TM,1)

    # exp terms are strictly positive, so sum > 0 <=> selection nonempty
    row_valid = row_ids < n_valid                             # exclude padded rows
    valid = jnp.logical_and(jnp.logical_and(pos_sum > 0.0, neg_sum > 0.0),
                            row_valid)

    pos_loss = (1.0 / pos_w) * jnp.log(1.0 + pos_sum)
    neg_loss = (1.0 / neg_w) * jnp.log(1.0 + neg_sum)
    per_row = jnp.where(valid, pos_loss + neg_loss, 0.0)      # (TM, 1)

    o_ref[...] = jnp.full((8, _LANE), jnp.sum(per_row), dtype=jnp.float32)


def margin_multisimilarity_loss(batch, labels, beta,
                                pos_w=POS_WEIGHT, neg_w=NEG_WEIGHT,
                                margin=MARGIN, tm=128):
    """batch: (B, D) f32, labels: (B,) int32, beta: (n_classes,) f32.

    Note (perf): on v6e with large B*D, tm=256 halves the grid-step overhead and
    fits easily in 128 MiB VMEM; keep tm=128 on v5e/v7x.
    """
    B, D = batch.shape
    assert tm % _LANE == 0, "row tile must be a multiple of 128 for lane density"

    labels = labels.astype(jnp.int32)
    x = batch.astype(jnp.float32)
    beta_rows = beta.astype(jnp.float32)[labels]        # glue: tiny param gather

    b_pad = -(-B // tm) * tm                            # pad B to a multiple of TM
    pad = b_pad - B
    if pad:
        x = jnp.pad(x, ((0, pad), (0, 0)))
        labels_p = jnp.pad(labels, (0, pad), constant_values=-1)
        beta_rows = jnp.pad(beta_rows, (0, pad), constant_values=BETA_INIT)
    else:
        labels_p = labels

    lcol = labels_p.reshape(b_pad, 1)
    lrow = labels_p.reshape(1, b_pad)
    beta_col = beta_rows.reshape(b_pad, 1)

    n_tiles = b_pad // tm
    kernel = functools.partial(_ms_loss_kernel,
                               pos_w=float(pos_w), neg_w=float(neg_w),
                               margin=float(margin), n_valid=B, tm=tm)

    # Re-derived VMEM budget: single-buffered resident x + label/beta columns +
    # ~10 live (TM, B_pad) f32 temporaries, 2x headroom, clamped to [32, 96] MiB.
    approx_bytes = 4 * (b_pad * D + 3 * b_pad + 10 * tm * b_pad)
    vmem_limit = int(min(max(2 * approx_bytes, 32 * 1024 * 1024),
                         96 * 1024 * 1024))

    def run(single_buffer_residents):
        def resident_spec(shape):
            index_map = lambda i, _s=shape: (0,) * len(_s)
            if single_buffer_residents:
                # constant-index residents: double-buffering only wastes VMEM
                return pl.BlockSpec(shape, index_map,
                                    pipeline_mode=pl.Buffered(buffer_count=1))
            return pl.BlockSpec(shape, index_map)

        return pl.pallas_call(
            kernel,
            out_shape=jax.ShapeDtypeStruct((n_tiles * 8, _LANE), jnp.float32),
            grid=(n_tiles,),
            in_specs=[
                resident_spec((b_pad, D)),      # full x, resident (tile sliced in-kernel)
                resident_spec((b_pad, 1)),      # labels, column layout
                resident_spec((1, b_pad)),      # labels, row layout
                resident_spec((b_pad, 1)),      # beta per row
            ],
            out_specs=pl.BlockSpec((8, _LANE), lambda i: (i, 0)),
            compiler_params=pltpu.CompilerParams(
                dimension_semantics=("parallel",),   # shard row tiles over TCs (v7x)
                vmem_limit_bytes=vmem_limit),
        )(x, lcol, lrow, beta_col)

    try:
        partials = run(single_buffer_residents=True)
    except Exception:
        # Fallback for Pallas builds where Buffered(1) is not supported in
        # pallas_call pipelining; kernel body is identical in both paths.
        partials = run(single_buffer_residents=False)

    # one replicated partial per tile; pick one lane each and reduce
    return jnp.sum(partials[::8, 0]) / jnp.float32(B)


def _reference_loss(batch, labels, beta,
                    pos_w=POS_WEIGHT, neg_w=NEG_WEIGHT, margin=MARGIN):
    """Pure-JAX reference mirroring the PyTorch forward (max_min, learned beta)."""
    B = batch.shape[0]
    sim = jnp.dot(batch, batch.T, preferred_element_type=jnp.float32)
    labels = labels.astype(jnp.int32)
    same = labels[:, None] == labels[None, :]
    not_self = ~jnp.eye(B, dtype=bool)
    pos_mask = same & not_self & (sim < 1.0 - EPSILON)
    neg_mask = ~same
    big = 1e30
    min_pos = jnp.min(jnp.where(pos_mask, sim, big), axis=1, keepdims=True)
    max_neg = jnp.max(jnp.where(neg_mask, sim, -big), axis=1, keepdims=True)
    sel_neg = neg_mask & ((sim + margin) > min_pos)
    sel_pos = pos_mask & ((sim - margin) < max_neg)
    valid = (sel_neg.sum(1, keepdims=True) > 0) & (sel_pos.sum(1, keepdims=True) > 0)
    b = beta[labels].reshape(B, 1)
    pos_sum = jnp.sum(jnp.where(sel_pos, jnp.exp(-pos_w * (sim - b)), 0.0), 1, keepdims=True)
    neg_sum = jnp.sum(jnp.where(sel_neg, jnp.exp(neg_w * (sim - b)), 0.0), 1, keepdims=True)
    per_row = jnp.where(valid,
                        (1.0 / pos_w) * jnp.log(1.0 + pos_sum)
                        + (1.0 / neg_w) * jnp.log(1.0 + neg_sum),
                        0.0)
    return jnp.sum(per_row) / B


if __name__ == "__main__":
    key = jax.random.PRNGKey(0)

    # --- test 1: tiny batch (exercises row/column padding, single tile) ---
    B1, D1, C1 = 8, 32, 4
    k1, k2 = jax.random.split(key)
    x1 = jax.random.normal(k1, (B1, D1), dtype=jnp.float32)
    x1 = x1 / jnp.linalg.norm(x1, axis=1, keepdims=True)
    labels1 = jnp.array([0, 0, 1, 1, 2, 2, 3, 3], dtype=jnp.int32)
    beta1 = jnp.ones((C1,), dtype=jnp.float32) * BETA_INIT

    loss1 = jax.block_until_ready(margin_multisimilarity_loss(x1, labels1, beta1))
    ref1 = _reference_loss(x1, labels1, beta1)
    assert jnp.allclose(loss1, ref1, rtol=1e-4, atol=1e-4), (loss1, ref1)

    # --- test 2: larger batch (exercises multiple row tiles + padding) ---
    B2, D2, C2 = 192, 64, 24
    x2 = jax.random.normal(k2, (B2, D2), dtype=jnp.float32)
    x2 = x2 / jnp.linalg.norm(x2, axis=1, keepdims=True)
    labels2 = jnp.repeat(jnp.arange(C2, dtype=jnp.int32), B2 // C2)
    beta2 = jnp.ones((C2,), dtype=jnp.float32) * BETA_INIT

    loss2 = jax.block_until_ready(margin_multisimilarity_loss(x2, labels2, beta2))
    ref2 = _reference_loss(x2, labels2, beta2)
    assert jnp.allclose(loss2, ref2, rtol=1e-4, atol=1e-4), (loss2, ref2)

    print("KERNEL_OK")
</pallas_src>

<mosaic_0001>
module attributes {stable_mosaic.version = 11 : i64} {
  func.func @_ms_loss_kernel(%arg0: i32, %arg1: memref<128x32xf32, #tpu.memory_space<vmem>>, %arg2: memref<128x1xi32, #tpu.memory_space<vmem>>, %arg3: memref<1x128xi32, #tpu.memory_space<vmem>>, %arg4: memref<128x1xf32, #tpu.memory_space<vmem>>, %arg5: memref<8x128xf32, #tpu.memory_space<vmem>>) attributes {dimension_semantics = [#tpu.dimension_semantics<parallel>], iteration_bounds = array<i64: 1>, scalar_prefetch = 0 : i64, scratch_operands = 0 : i64, tpu.core_type = #tpu.core_type<tc>, window_params = [{pipeline_mode = #tpu.pipeline_mode<synchronous>, transform_indices = @transform_0, window_bounds = array<i64: 128, 32>}, {pipeline_mode = #tpu.pipeline_mode<synchronous>, transform_indices = @transform_1, window_bounds = array<i64: 128, 1>}, {pipeline_mode = #tpu.pipeline_mode<synchronous>, transform_indices = @transform_2, window_bounds = array<i64: 1, 128>}, {pipeline_mode = #tpu.pipeline_mode<synchronous>, transform_indices = @transform_3, window_bounds = array<i64: 128, 1>}, {transform_indices = @transform_4, window_bounds = array<i64: 8, 128>}]} {
    %c128_i32 = arith.constant 128 : i32
    %0 = arith.muli %arg0, %c128_i32 : i32
    %1 = tpu.assume_multiple %0, 128 : i32
    %2 = arith.index_cast %1 : i32 to index
    %c0 = arith.constant 0 : index
    %3 = vector.load %arg1[%2, %c0] : memref<128x32xf32, #tpu.memory_space<vmem>>, vector<128x32xf32>
    %c0_0 = arith.constant 0 : index
    %c0_1 = arith.constant 0 : index
    %4 = vector.load %arg1[%c0_0, %c0_1] : memref<128x32xf32, #tpu.memory_space<vmem>>, vector<128x32xf32>
    %cst = arith.constant dense<0.000000e+00> : vector<128x128xf32>
    %5 = tpu.matmul %3, %4, %cst {dimension_numbers = #tpu.dot_dimension_numbers<[1], [1], [0], [0], [0, 0, 1, 0], [], []>} : vector<128x32xf32>, vector<128x32xf32>, vector<128x128xf32> -> vector<128x128xf32>
    %6 = arith.index_cast %1 : i32 to index
    %c0_2 = arith.constant 0 : index
    %7 = vector.load %arg2[%6, %c0_2] : memref<128x1xi32, #tpu.memory_space<vmem>>, vector<128x1xi32>
    %c0_3 = arith.constant 0 : index
    %c0_4 = arith.constant 0 : index
    %8 = vector.load %arg3[%c0_3, %c0_4] : memref<1x128xi32, #tpu.memory_space<vmem>>, vector<1x128xi32>
    %9 = arith.index_cast %1 : i32 to index
    %c0_5 = arith.constant 0 : index
    %10 = vector.load %arg4[%9, %c0_5] : memref<128x1xf32, #tpu.memory_space<vmem>>, vector<128x1xf32>
    %11 = vector.broadcast %7 : vector<128x1xi32> to vector<128x128xi32>
    %12 = vector.broadcast %8 : vector<1x128xi32> to vector<128x128xi32>
    %13 = arith.cmpi eq, %11, %12 : vector<128x128xi32>
    %14 = tpu.iota {dimensions = array<i32: 1>} : vector<128x128xi32>
    %15 = tpu.iota {dimensions = array<i32: 0>} : vector<128x1xi32>
    %16 = vector.broadcast %1 : i32 to vector<128x1xi32>
    %17 = arith.addi %15, %16 : vector<128x1xi32>
    %18 = vector.broadcast %17 : vector<128x1xi32> to vector<128x128xi32>
    %19 = arith.cmpi ne, %14, %18 : vector<128x128xi32>
    %20 = arith.andi %13, %19 : vector<128x128xi1>
    %cst_6 = arith.constant 0.999989986 : f32
    %21 = vector.broadcast %cst_6 : f32 to vector<128x128xf32>
    %22 = arith.cmpf olt, %5, %21 : vector<128x128xf32>
    %23 = arith.andi %20, %22 : vector<128x128xi1>
    %cst_7 = arith.constant dense<true> : vector<128x128xi1>
    %24 = arith.xori %13, %cst_7 : vector<128x128xi1>
    %c8_i32 = arith.constant 8 : i32
    %25 = vector.broadcast %c8_i32 : i32 to vector<128x128xi32>
    %26 = arith.cmpi slt, %14, %25 : vector<128x128xi32>
    %27 = arith.andi %24, %26 : vector<128x128xi1>
    %cst_8 = arith.constant 1.000000e+30 : f32
    %28 = vector.broadcast %cst_8 : f32 to vector<128x128xf32>
    %29 = arith.select %23, %5, %28 : vector<128x128xi1>, vector<128x128xf32>
    %cst_9 = arith.constant dense<0x7F800000> : vector<128xf32>
    %30 = vector.multi_reduction <minimumf>, %29, %cst_9 [1] : vector<128x128xf32> to vector<128xf32>
    %31 = vector.shape_cast %30 : vector<128xf32> to vector<128x1xf32>
    %cst_10 = arith.constant 0.000000e+00 : f32
    %cst_11 = arith.constant 1.000000e+30 : f32
    %32 = arith.subf %cst_10, %cst_11 : f32
    %33 = vector.broadcast %32 : f32 to vector<128x128xf32>
    %34 = arith.select %27, %5, %33 : vector<128x128xi1>, vector<128x128xf32>
    %cst_12 = arith.constant dense<0xFF800000> : vector<128xf32>
    %35 = vector.multi_reduction <maximumf>, %34, %cst_12 [1] : vector<128x128xf32> to vector<128xf32>
    %36 = vector.shape_cast %35 : vector<128xf32> to vector<128x1xf32>
    %cst_13 = arith.constant 1.000000e-01 : f32
    %37 = vector.broadcast %cst_13 : f32 to vector<128x128xf32>
    %38 = arith.addf %5, %37 : vector<128x128xf32>
    %39 = vector.broadcast %31 : vector<128x1xf32> to vector<128x128xf32>
    %40 = arith.cmpf ogt, %38, %39 : vector<128x128xf32>
    %41 = arith.andi %27, %40 : vector<128x128xi1>
    %cst_14 = arith.constant 1.000000e-01 : f32
    %42 = vector.broadcast %cst_14 : f32 to vector<128x128xf32>
    %43 = arith.subf %5, %42 : vector<128x128xf32>
    %44 = vector.broadcast %36 : vector<128x1xf32> to vector<128x128xf32>
    %45 = arith.cmpf olt, %43, %44 : vector<128x128xf32>
    %46 = arith.andi %23, %45 : vector<128x128xi1>
    %cst_15 = arith.constant -2.000000e+00 : f32
    %cst_16 = arith.constant 4.000000e+01 : f32
    %47 = vector.broadcast %cst_15 : f32 to vector<128x128xf32>
    %48 = vector.broadcast %cst_16 : f32 to vector<128x128xf32>
    %49 = arith.select %46, %47, %48 : vector<128x128xi1>, vector<128x128xf32>
    %50 = vector.broadcast %10 : vector<128x1xf32> to vector<128x128xf32>
    %51 = arith.subf %5, %50 : vector<128x128xf32>
    %52 = arith.mulf %49, %51 : vector<128x128xf32>
    %53 = math.exp %52 : vector<128x128xf32>
    %cst_17 = arith.constant 0.000000e+00 : f32
    %54 = vector.broadcast %cst_17 : f32 to vector<128x128xf32>
    %55 = arith.select %46, %53, %54 : vector<128x128xi1>, vector<128x128xf32>
    %cst_18 = arith.constant dense<0.000000e+00> : vector<128xf32>
    %56 = vector.multi_reduction <add>, %55, %cst_18 [1] : vector<128x128xf32> to vector<128xf32>
    %57 = vector.shape_cast %56 : vector<128xf32> to vector<128x1xf32>
    %cst_19 = arith.constant 0.000000e+00 : f32
    %58 = vector.broadcast %cst_19 : f32 to vector<128x128xf32>
    %59 = arith.select %41, %53, %58 : vector<128x128xi1>, vector<128x128xf32>
    %cst_20 = arith.constant dense<0.000000e+00> : vector<128xf32>
    %60 = vector.multi_reduction <add>, %59, %cst_20 [1] : vector<128x128xf32> to vector<128xf32>
    %61 = vector.shape_cast %60 : vector<128xf32> to vector<128x1xf32>
    %c8_i32_21 = arith.constant 8 : i32
    %62 = vector.broadcast %c8_i32_21 : i32 to vector<128x1xi32>
    %63 = arith.cmpi slt, %17, %62 : vector<128x1xi32>
    %cst_22 = arith.constant 0.000000e+00 : f32
    %64 = vector.broadcast %cst_22 : f32 to vector<128x1xf32>
    %65 = arith.cmpf ogt, %57, %64 : vector<128x1xf32>
    %cst_23 = arith.constant 0.000000e+00 : f32
    %66 = vector.broadcast %cst_23 : f32 to vector<128x1xf32>
    %67 = arith.cmpf ogt, %61, %66 : vector<128x1xf32>
    %68 = arith.andi %65, %67 : vector<128x1xi1>
    %69 = arith.andi %68, %63 : vector<128x1xi1>
    %cst_24 = arith.constant 1.000000e+00 : f32
    %70 = vector.broadcast %cst_24 : f32 to vector<128x1xf32>
    %71 = arith.addf %70, %57 : vector<128x1xf32>
    %72 = math.log %71 : vector<128x1xf32>
    %cst_25 = arith.constant 5.000000e-01 : f32
    %73 = vector.broadcast %cst_25 : f32 to vector<128x1xf32>
    %74 = arith.mulf %73, %72 : vector<128x1xf32>
    %cst_26 = arith.constant 1.000000e+00 : f32
    %75 = vector.broadcast %cst_26 : f32 to vector<128x1xf32>
    %76 = arith.addf %75, %61 : vector<128x1xf32>
    %77 = math.log %76 : vector<128x1xf32>
    %cst_27 = arith.constant 2.500000e-02 : f32
    %78 = vector.broadcast %cst_27 : f32 to vector<128x1xf32>
    %79 = arith.mulf %78, %77 : vector<128x1xf32>
    %80 = arith.addf %74, %79 : vector<128x1xf32>
    %cst_28 = arith.constant 0.000000e+00 : f32
    %81 = vector.broadcast %cst_28 : f32 to vector<128x1xf32>
    %82 = arith.select %69, %80, %81 : vector<128x1xi1>, vector<128x1xf32>
    %83 = vector.shape_cast %82 : vector<128x1xf32> to vector<1x128x1xf32>
    %cst_29 = arith.constant dense<0.000000e+00> : vector<1xf32>
    %84 = vector.multi_reduction <add>, %83, %cst_29 [1, 2] : vector<1x128x1xf32> to vector<1xf32>
    %85 = vector.shape_cast %84 : vector<1xf32> to vector<1x1x1xf32>
    %86 = vector.extract %85[0, 0, 0] : f32 from vector<1x1x1xf32>
    %87 = vector.broadcast %86 : f32 to vector<8x128xf32>
    %c0_30 = arith.constant 0 : index
    %c0_31 = arith.constant 0 : index
    %88 = vector.load %arg5[%c0_30, %c0_31] : memref<8x128xf32, #tpu.memory_space<vmem>>, vector<8x128xf32>
    tpu.vector_store %arg5[%c0_30, %c0_31], %87 {strides = array<i32>} : memref<8x128xf32, #tpu.memory_space<vmem>>, vector<8x128xf32>,
    return
  }
  func.func @transform_0(%arg0: i32) -> (i32, i32) {
    %c0_i32 = arith.constant 0 : i32
    %c0_i32_0 = arith.constant 0 : i32
    %c0_i32_1 = arith.constant 0 : i32
    return %c0_i32, %c0_i32_0 : i32, i32
  }
  func.func @transform_1(%arg0: i32) -> (i32, i32) {
    %c0_i32 = arith.constant 0 : i32
    %c0_i32_0 = arith.constant 0 : i32
    %c0_i32_1 = arith.constant 0 : i32
    return %c0_i32, %c0_i32_0 : i32, i32
  }
  func.func @transform_2(%arg0: i32) -> (i32, i32) {
    %c0_i32 = arith.constant 0 : i32
    %c0_i32_0 = arith.constant 0 : i32
    %c0_i32_1 = arith.constant 0 : i32
    return %c0_i32, %c0_i32_0 : i32, i32
  }
  func.func @transform_3(%arg0: i32) -> (i32, i32) {
    %c0_i32 = arith.constant 0 : i32
    %c0_i32_0 = arith.constant 0 : i32
    %c0_i32_1 = arith.constant 0 : i32
    return %c0_i32, %c0_i32_0 : i32, i32
  }
  func.func @transform_4(%arg0: i32) -> (i32, i32) {
    %c0_i32 = arith.constant 0 : i32
    %c0_i32_0 = arith.constant 0 : i32
    return %arg0, %c0_i32 : i32, i32
  }
}

module attributes {stable_mosaic.version = 11 : i64} {
  func.func @_ms_loss_kernel(%arg0: i32, %arg1: memref<128x32xf32, #tpu.memory_space<vmem>>, %arg2: memref<128x1xi32, #tpu.memory_space<vmem>>, %arg3: memref<1x128xi32, #tpu.memory_space<vmem>>, %arg4: memref<128x1xf32, #tpu.memory_space<vmem>>, %arg5: memref<8x128xf32, #tpu.memory_space<vmem>>) attributes {dimension_semantics = [#tpu.dimension_semantics<parallel>], iteration_bounds = array<i64: 1>, scalar_prefetch = 0 : i64, scratch_operands = 0 : i64, tpu.core_type = #tpu.core_type<tc>, window_params = [{pipeline_mode = #tpu.pipeline_mode<synchronous>, transform_indices = @transform_0, window_bounds = array<i64: 128, 32>}, {pipeline_mode = #tpu.pipeline_mode<synchronous>, transform_indices = @transform_1, window_bounds = array<i64: 128, 1>}, {pipeline_mode = #tpu.pipeline_mode<synchronous>, transform_indices = @transform_2, window_bounds = array<i64: 1, 128>}, {pipeline_mode = #tpu.pipeline_mode<synchronous>, transform_indices = @transform_3, window_bounds = array<i64: 128, 1>}, {transform_indices = @transform_4, window_bounds = array<i64: 8, 128>}]} {
    %c128_i32 = arith.constant 128 : i32
    %0 = arith.muli %arg0, %c128_i32 : i32
    %1 = tpu.assume_multiple %0, 128 : i32
    %2 = arith.index_cast %1 : i32 to index
    %c0 = arith.constant 0 : index
    %3 = vector.load %arg1[%2, %c0] : memref<128x32xf32, #tpu.memory_space<vmem>>, vector<128x32xf32>
    %c0_0 = arith.constant 0 : index
    %c0_1 = arith.constant 0 : index
    %4 = vector.load %arg1[%c0_0, %c0_1] : memref<128x32xf32, #tpu.memory_space<vmem>>, vector<128x32xf32>
    %cst = arith.constant dense<0.000000e+00> : vector<128x128xf32>
    %5 = tpu.matmul %3, %4, %cst {dimension_numbers = #tpu.dot_dimension_numbers<[1], [1], [0], [0], [0, 0, 1, 0], [], []>} : vector<128x32xf32>, vector<128x32xf32>, vector<128x128xf32> -> vector<128x128xf32>
    %6 = arith.index_cast %1 : i32 to index
    %c0_2 = arith.constant 0 : index
    %7 = vector.load %arg2[%6, %c0_2] : memref<128x1xi32, #tpu.memory_space<vmem>>, vector<128x1xi32>
    %c0_3 = arith.constant 0 : index
    %c0_4 = arith.constant 0 : index
    %8 = vector.load %arg3[%c0_3, %c0_4] : memref<1x128xi32, #tpu.memory_space<vmem>>, vector<1x128xi32>
    %9 = arith.index_cast %1 : i32 to index
    %c0_5 = arith.constant 0 : index
    %10 = vector.load %arg4[%9, %c0_5] : memref<128x1xf32, #tpu.memory_space<vmem>>, vector<128x1xf32>
    %11 = vector.broadcast %7 : vector<128x1xi32> to vector<128x128xi32>
    %12 = vector.broadcast %8 : vector<1x128xi32> to vector<128x128xi32>
    %13 = arith.cmpi eq, %11, %12 : vector<128x128xi32>
    %14 = tpu.iota {dimensions = array<i32: 1>} : vector<128x128xi32>
    %15 = tpu.iota {dimensions = array<i32: 0>} : vector<128x1xi32>
    %16 = vector.broadcast %1 : i32 to vector<128x1xi32>
    %17 = arith.addi %15, %16 : vector<128x1xi32>
    %18 = vector.broadcast %17 : vector<128x1xi32> to vector<128x128xi32>
    %19 = arith.cmpi ne, %14, %18 : vector<128x128xi32>
    %20 = arith.andi %13, %19 : vector<128x128xi1>
    %cst_6 = arith.constant 0.999989986 : f32
    %21 = vector.broadcast %cst_6 : f32 to vector<128x128xf32>
    %22 = arith.cmpf olt, %5, %21 : vector<128x128xf32>
    %23 = arith.andi %20, %22 : vector<128x128xi1>
    %cst_7 = arith.constant dense<true> : vector<128x128xi1>
    %24 = arith.xori %13, %cst_7 : vector<128x128xi1>
    %c8_i32 = arith.constant 8 : i32
    %25 = vector.broadcast %c8_i32 : i32 to vector<128x128xi32>
    %26 = arith.cmpi slt, %14, %25 : vector<128x128xi32>
    %27 = arith.andi %24, %26 : vector<128x128xi1>
    %cst_8 = arith.constant 1.000000e+30 : f32
    %28 = vector.broadcast %cst_8 : f32 to vector<128x128xf32>
    %29 = arith.select %23, %5, %28 : vector<128x128xi1>, vector<128x128xf32>
    %cst_9 = arith.constant dense<0x7F800000> : vector<128xf32>
    %30 = vector.multi_reduction <minimumf>, %29, %cst_9 [1] : vector<128x128xf32> to vector<128xf32>
    %31 = vector.shape_cast %30 : vector<128xf32> to vector<128x1xf32>
    %cst_10 = arith.constant 0.000000e+00 : f32
    %cst_11 = arith.constant 1.000000e+30 : f32
    %32 = arith.subf %cst_10, %cst_11 : f32
    %33 = vector.broadcast %32 : f32 to vector<128x128xf32>
    %34 = arith.select %27, %5, %33 : vector<128x128xi1>, vector<128x128xf32>
    %cst_12 = arith.constant dense<0xFF800000> : vector<128xf32>
    %35 = vector.multi_reduction <maximumf>, %34, %cst_12 [1] : vector<128x128xf32> to vector<128xf32>
    %36 = vector.shape_cast %35 : vector<128xf32> to vector<128x1xf32>
    %cst_13 = arith.constant 1.000000e-01 : f32
    %37 = vector.broadcast %cst_13 : f32 to vector<128x128xf32>
    %38 = arith.addf %5, %37 : vector<128x128xf32>
    %39 = vector.broadcast %31 : vector<128x1xf32> to vector<128x128xf32>
    %40 = arith.cmpf ogt, %38, %39 : vector<128x128xf32>
    %41 = arith.andi %27, %40 : vector<128x128xi1>
    %cst_14 = arith.constant 1.000000e-01 : f32
    %42 = vector.broadcast %cst_14 : f32 to vector<128x128xf32>
    %43 = arith.subf %5, %42 : vector<128x128xf32>
    %44 = vector.broadcast %36 : vector<128x1xf32> to vector<128x128xf32>
    %45 = arith.cmpf olt, %43, %44 : vector<128x128xf32>
    %46 = arith.andi %23, %45 : vector<128x128xi1>
    %cst_15 = arith.constant -2.000000e+00 : f32
    %cst_16 = arith.constant 4.000000e+01 : f32
    %47 = vector.broadcast %cst_15 : f32 to vector<128x128xf32>
    %48 = vector.broadcast %cst_16 : f32 to vector<128x128xf32>
    %49 = arith.select %46, %47, %48 : vector<128x128xi1>, vector<128x128xf32>
    %50 = vector.broadcast %10 : vector<128x1xf32> to vector<128x128xf32>
    %51 = arith.subf %5, %50 : vector<128x128xf32>
    %52 = arith.mulf %49, %51 : vector<128x128xf32>
    %53 = math.exp %52 : vector<128x128xf32>
    %cst_17 = arith.constant 0.000000e+00 : f32
    %54 = vector.broadcast %cst_17 : f32 to vector<128x128xf32>
    %55 = arith.select %46, %53, %54 : vector<128x128xi1>, vector<128x128xf32>
    %cst_18 = arith.constant dense<0.000000e+00> : vector<128xf32>
    %56 = vector.multi_reduction <add>, %55, %cst_18 [1] : vector<128x128xf32> to vector<128xf32>
    %57 = vector.shape_cast %56 : vector<128xf32> to vector<128x1xf32>
    %cst_19 = arith.constant 0.000000e+00 : f32
    %58 = vector.broadcast %cst_19 : f32 to vector<128x128xf32>
    %59 = arith.select %41, %53, %58 : vector<128x128xi1>, vector<128x128xf32>
    %cst_20 = arith.constant dense<0.000000e+00> : vector<128xf32>
    %60 = vector.multi_reduction <add>, %59, %cst_20 [1] : vector<128x128xf32> to vector<128xf32>
    %61 = vector.shape_cast %60 : vector<128xf32> to vector<128x1xf32>
    %c8_i32_21 = arith.constant 8 : i32
    %62 = vector.broadcast %c8_i32_21 : i32 to vector<128x1xi32>
    %63 = arith.cmpi slt, %17, %62 : vector<128x1xi32>
    %cst_22 = arith.constant 0.000000e+00 : f32
    %64 = vector.broadcast %cst_22 : f32 to vector<128x1xf32>
    %65 = arith.cmpf ogt, %57, %64 : vector<128x1xf32>
    %cst_23 = arith.constant 0.000000e+00 : f32
    %66 = vector.broadcast %cst_23 : f32 to vector<128x1xf32>
    %67 = arith.cmpf ogt, %61, %66 : vector<128x1xf32>
    %68 = arith.andi %65, %67 : vector<128x1xi1>
    %69 = arith.andi %68, %63 : vector<128x1xi1>
    %cst_24 = arith.constant 1.000000e+00 : f32
    %70 = vector.broadcast %cst_24 : f32 to vector<128x1xf32>
    %71 = arith.addf %70, %57 : vector<128x1xf32>
    %72 = math.log %71 : vector<128x1xf32>
    %cst_25 = arith.constant 5.000000e-01 : f32
    %73 = vector.broadcast %cst_25 : f32 to vector<128x1xf32>
    %74 = arith.mulf %73, %72 : vector<128x1xf32>
    %cst_26 = arith.constant 1.000000e+00 : f32
    %75 = vector.broadcast %cst_26 : f32 to vector<128x1xf32>
    %76 = arith.addf %75, %61 : vector<128x1xf32>
    %77 = math.log %76 : vector<128x1xf32>
    %cst_27 = arith.constant 2.500000e-02 : f32
    %78 = vector.broadcast %cst_27 : f32 to vector<128x1xf32>
    %79 = arith.mulf %78, %77 : vector<128x1xf32>
    %80 = arith.addf %74, %79 : vector<128x1xf32>
    %cst_28 = arith.constant 0.000000e+00 : f32
    %81 = vector.broadcast %cst_28 : f32 to vector<128x1xf32>
    %82 = arith.select %69, %80, %81 : vector<128x1xi1>, vector<128x1xf32>
    %83 = vector.shape_cast %82 : vector<128x1xf32> to vector<1x128x1xf32>
    %cst_29 = arith.constant dense<0.000000e+00> : vector<1xf32>
    %84 = vector.multi_reduction <add>, %83, %cst_29 [1, 2] : vector<1x128x1xf32> to vector<1xf32>
    %85 = vector.shape_cast %84 : vector<1xf32> to vector<1x1x1xf32>
    %86 = vector.extract %85[0, 0, 0] : f32 from vector<1x1x1xf32>
    %87 = vector.broadcast %86 : f32 to vector<8x128xf32>
    %c0_30 = arith.constant 0 : index
    %c0_31 = arith.constant 0 : index
    %88 = vector.load %arg5[%c0_30, %c0_31] : memref<8x128xf32, #tpu.memory_space<vmem>>, vector<8x128xf32>
    tpu.vector_store %arg5[%c0_30, %c0_31], %87 {strides = array<i32>} : memref<8x128xf32, #tpu.memory_space<vmem>>, vector<8x128xf32>,
    return
  }
  func.func @transform_0(%arg0: i32) -> (i32, i32) {
    %c0_i32 = arith.constant 0 : i32
    %c0_i32_0 = arith.constant 0 : i32
    %c0_i32_1 = arith.constant 0 : i32
    return %c0_i32, %c0_i32_0 : i32, i32
  }
  func.func @transform_1(%arg0: i32) -> (i32, i32) {
    %c0_i32 = arith.constant 0 : i32
    %c0_i32_0 = arith.constant 0 : i32
    %c0_i32_1 = arith.constant 0 : i32
    return %c0_i32, %c0_i32_0 : i32, i32
  }
  func.func @transform_2(%arg0: i32) -> (i32, i32) {
    %c0_i32 = arith.constant 0 : i32
    %c0_i32_0 = arith.constant 0 : i32
    %c0_i32_1 = arith.constant 0 : i32
    return %c0_i32, %c0_i32_0 : i32, i32
  }
  func.func @transform_3(%arg0: i32) -> (i32, i32) {
    %c0_i32 = arith.constant 0 : i32
    %c0_i32_0 = arith.constant 0 : i32
    %c0_i32_1 = arith.constant 0 : i32
    return %c0_i32, %c0_i32_0 : i32, i32
  }
  func.func @transform_4(%arg0: i32) -> (i32, i32) {
    %c0_i32 = arith.constant 0 : i32
    %c0_i32_0 = arith.constant 0 : i32
    return %arg0, %c0_i32 : i32, i32
  }
}

</mosaic_0001>

<llo_original>
// kernel: tpu_custom_call.1
$region0: #{tpu_custom_call.1}
  #allocation0 [shape = 'u32[]', space=smem, size = 0x4, offset = 0x4, fixed_abs, tag = 'smem constant byte address 0x4 - core index']
  #allocation1 [shape = 'u32[144,128]{1,0:T(1,128)}', space=vmem, size = 0x12000, scoped, tag = 'internal scratch']
  %s0 = inlined_call_operand.vmem [shape: f32[128,32], index: 0, kind: input, shape index: {}]
  %s1 = inlined_call_operand.vmem [shape: s32[128,1], index: 1, kind: input, shape index: {}]
  %s2 = inlined_call_operand.vmem [shape: s32[1,128], index: 2, kind: input, shape index: {}]
  %s3 = inlined_call_operand.vmem [shape: f32[128,1], index: 3, kind: input, shape index: {}]
  %s4 = inlined_call_operand.hbm [shape: f32[8,128], index: 4, kind: output, shape index: {}]
  %s5 = sld [smem:[#allocation0]]
  $region26: #{tpu_custom_call.1} parent=0
    _
  %s7 = ssub.s32 1, %s5
  %s8 = scalar_select 0, %s7, %s5
  $region1: #{tpu_custom_call.1} parent=0
    #allocation2 [shape = 'u8[4096]{0}', space=vmem, size = 0x1000, scoped, tag = 'output window, operand 0, single buffered']
    #allocation3 [shape = 's32[1]{0}', space=sflag, size = 0x4, scoped, tag = 'scoped memory for tpu_custom_call.1']
    %9 = vsyncpa [#allocation3], 0
    // Predicated region
    $region2: #{tpu_custom_call.1} parent=1 // pred_check
      _
    $region3: #{tpu_custom_call.1} parent=1 // pred_check_branch
      %11 = sbr.rel (0) target = $region5
    $region4: #{tpu_custom_call.1} parent=1 // pred_region
      _
    $region5: #{tpu_custom_call.1} parent=1 // pred_fallthru
      _
    // Predicated region
    $region6: #{tpu_custom_call.1} parent=1 // pred_check
      _
    $region7: #{tpu_custom_call.1} parent=1 // pred_check_branch
      %13 = sbr.rel (0) target = $region9
    $region8: #{tpu_custom_call.1} parent=1 // pred_region
      _
    $region9: #{tpu_custom_call.1} parent=1 // pred_fallthru
      _
    // Predicated region
    $region10: #{tpu_custom_call.1} parent=1 // pred_check
      _
    $region11: #{tpu_custom_call.1} parent=1 // pred_check_branch
      %15 = sbr.rel (0) target = $region13
    $region12: #{tpu_custom_call.1} parent=1 // pred_region
      _
    $region13: #{tpu_custom_call.1} parent=1 // pred_fallthru
      _
    // Predicated region
    $region14: #{tpu_custom_call.1} parent=1 // pred_check
      _
    $region15: #{tpu_custom_call.1} parent=1 // pred_check_branch
      %17 = sbr.rel (0) target = $region17
    $region16: #{tpu_custom_call.1} parent=1 // pred_region
      _
    $region17: #{tpu_custom_call.1} parent=1 // pred_fallthru
      _
    %s18 = smul.u32 0, 128
    %s19 = scalar_lea.vmem %s0, %s18
    %v20 = vld [vmem:[%s19] sm:$0xff]
    %v21 = vld [vmem:[%s19 + $0x8] sm:$0xff]
    %v22 = vld [vmem:[%s19 + $0x10] sm:$0xff]
    %v23 = vld [vmem:[%s19 + $0x18] sm:$0xff]
    %v24 = vld [vmem:[%s19 + $0x20] sm:$0xff]
    %v25 = vld [vmem:[%s19 + $0x28] sm:$0xff]
    %v26 = vld [vmem:[%s19 + $0x30] sm:$0xff]
    %v27 = vld [vmem:[%s19 + $0x38] sm:$0xff]
    %v28 = vld [vmem:[%s19 + $0x40] sm:$0xff]
    %v29 = vld [vmem:[%s19 + $0x48] sm:$0xff]
    %v30 = vld [vmem:[%s19 + $0x50] sm:$0xff]
    %v31 = vld [vmem:[%s19 + $0x58] sm:$0xff]
    %v32 = vld [vmem:[%s19 + $0x60] sm:$0xff]
    %v33 = vld [vmem:[%s19 + $0x68] sm:$0xff]
    %v34 = vld [vmem:[%s19 + $0x70] sm:$0xff]
    %v35 = vld [vmem:[%s19 + $0x78] sm:$0xff]
    %v36 = vld [vmem:[%s0] sm:$0xff]
    %v37 = vld [vmem:[%s0 + $0x8] sm:$0xff]
    %v38 = vld [vmem:[%s0 + $0x10] sm:$0xff]
    %v39 = vld [vmem:[%s0 + $0x18] sm:$0xff]
    %v40 = vld [vmem:[%s0 + $0x20] sm:$0xff]
    %v41 = vld [vmem:[%s0 + $0x28] sm:$0xff]
    %v42 = vld [vmem:[%s0 + $0x30] sm:$0xff]
    %v43 = vld [vmem:[%s0 + $0x38] sm:$0xff]
    %v44 = vld [vmem:[%s0 + $0x40] sm:$0xff]
    %v45 = vld [vmem:[%s0 + $0x48] sm:$0xff]
    %v46 = vld [vmem:[%s0 + $0x50] sm:$0xff]
    %v47 = vld [vmem:[%s0 + $0x58] sm:$0xff]
    %v48 = vld [vmem:[%s0 + $0x60] sm:$0xff]
    %v49 = vld [vmem:[%s0 + $0x68] sm:$0xff]
    %v50 = vld [vmem:[%s0 + $0x70] sm:$0xff]
    %v51 = vld [vmem:[%s0 + $0x78] sm:$0xff]
    %vm52 = vcmask 261120
    %v54 = vsel %vm52, %v20, 0
    %v57 = vsel %vm52, %v21, 0
    %v60 = vsel %vm52, %v22, 0
    %v63 = vsel %vm52, %v23, 0
    %v66 = vsel %vm52, %v24, 0
    %v69 = vsel %vm52, %v25, 0
    %v72 = vsel %vm52, %v26, 0
    %v75 = vsel %vm52, %v27, 0
    %v78 = vsel %vm52, %v28, 0
    %v81 = vsel %vm52, %v29, 0
    %v84 = vsel %vm52, %v30, 0
    %v87 = vsel %vm52, %v31, 0
    %v90 = vsel %vm52, %v32, 0
    %v93 = vsel %vm52, %v33, 0
    %v96 = vsel %vm52, %v34, 0
    %v99 = vsel %vm52, %v35, 0
    %v102 = vsel %vm52, %v36, 0
    %v105 = vsel %vm52, %v37, 0
    %v108 = vsel %vm52, %v38, 0
    %v111 = vsel %vm52, %v39, 0
    %v114 = vsel %vm52, %v40, 0
    %v117 = vsel %vm52, %v41, 0
    %v120 = vsel %vm52, %v42, 0
    %v123 = vsel %vm52, %v43, 0
    %v126 = vsel %vm52, %v44, 0
    %v129 = vsel %vm52, %v45, 0
    %v132 = vsel %vm52, %v46, 0
    %v135 = vsel %vm52, %v47, 0
    %v138 = vsel %vm52, %v48, 0
    %v141 = vsel %vm52, %v49, 0
    %v144 = vsel %vm52, %v50, 0
    %v147 = vsel %vm52, %v51, 0
    %149 = vmatprep.subr.mxu0 0.0
    %150 = vmatpush1.xpose.msra.mxu0 %v147
    %151 = vmatprep.subr.mxu0 0.0
    %152 = vmatpush1.xpose.msra.mxu0 %v144
    %153 = vmatprep.subr.mxu0 0.0
    %154 = vmatpush1.xpose.msra.mxu0 %v141
    %155 = vmatprep.subr.mxu0 0.0
    %156 = vmatpush1.xpose.msra.mxu0 %v138
    %157 = vmatprep.subr.mxu0 0.0
    %158 = vmatpush1.xpose.msra.mxu0 %v135
    %159 = vmatprep.subr.mxu0 0.0
    %160 = vmatpush1.xpose.msra.mxu0 %v132
    %161 = vmatprep.subr.mxu0 0.0
    %162 = vmatpush1.xpose.msra.mxu0 %v129
    %163 = vmatprep.subr.mxu0 0.0
    %164 = vmatpush1.xpose.msra.mxu0 %v126
    %165 = vmatprep.subr.mxu0 0.0
    %166 = vmatpush1.xpose.msra.mxu0 %v123
    %167 = vmatprep.subr.mxu0 0.0
    %168 = vmatpush1.xpose.msra.mxu0 %v120
    %169 = vmatprep.subr.mxu0 0.0
    %170 = vmatpush1.xpose.msra.mxu0 %v117
    %171 = vmatprep.subr.mxu0 0.0
    %172 = vmatpush1.xpose.msra.mxu0 %v114
    %173 = vmatprep.subr.mxu0 0.0
    %174 = vmatpush1.xpose.msra.mxu0 %v111
    %175 = vmatprep.subr.mxu0 0.0
    %176 = vmatpush1.xpose.msra.mxu0 %v108
    %177 = vmatprep.subr.mxu0 0.0
    %178 = vmatpush1.xpose.msra.mxu0 %v105
    %179 = vmatprep.subr.mxu0 0.0
    %180 = vmatpush1.xpose.msra.mxu0 %v102
    %181 = vmatprep.subr.mxu0 0.0
    %182 = vmatpush2.xpose.msra.mxu0 0.0
    %183 = vmatprep.subr.mxu0 0.0
    %184 = vmatpush2.xpose.msra.mxu0 0.0
    %185 = vmatprep.subr.mxu0 0.0
    %186 = vmatpush2.xpose.msra.mxu0 0.0
    %187 = vmatprep.subr.mxu0 0.0
    %188 = vmatpush2.xpose.msra.mxu0 0.0
    %189 = vmatprep.subr.mxu0 0.0
    %190 = vmatpush2.xpose.msra.mxu0 0.0
    %191 = vmatprep.subr.mxu0 0.0
    %192 = vmatpush2.xpose.msra.mxu0 0.0
    %193 = vmatprep.subr.mxu0 0.0
    %194 = vmatpush2.xpose.msra.mxu0 0.0
    %195 = vmatprep.subr.mxu0 0.0
    %196 = vmatpush2.xpose.msra.mxu0 0.0
    %197 = vmatprep.subr.mxu0 0.0
    %198 = vmatpush2.xpose.msra.mxu0 0.0
    %199 = vmatprep.subr.mxu0 0.0
    %200 = vmatpush2.xpose.msra.mxu0 0.0
    %201 = vmatprep.subr.mxu0 0.0
    %202 = vmatpush2.xpose.msra.mxu0 0.0
    %203 = vmatprep.subr.mxu0 0.0
    %204 = vmatpush2.xpose.msra.mxu0 0.0
    %205 = vmatprep.subr.mxu0 0.0
    %206 = vmatpush2.xpose.msra.mxu0 0.0
    %207 = vmatprep.subr.mxu0 0.0
    %208 = vmatpush2.xpose.msra.mxu0 0.0
    %209 = vmatprep.subr.mxu0 0.0
    %210 = vmatpush2.xpose.msra.mxu0 0.0
    %211 = vmatprep.subr.mxu0 0.0
    %212 = vmatpush2.xpose.msra.mxu0 0.0
    %213 = vmatprep.mubr.f32.mxu0 0.0
    %214 = vmatmul.mubr.f32.gmra.mxu0 %v54
    %v215 = vpop.f32.mrf.mxu0
    %v216 = vadd.f32 0.0, %v215
    %v217 = vpop.f32.mrf.mxu0
    %218 = vmatprep.mubr.f32.mxu0 0.0
    %219 = vmatmul.mubr.f32.gmra.mxu0 %v57
    %v220 = vpop.f32.mrf.mxu0
    %v221 = vadd.f32 0.0, %v220
    %v222 = vpop.f32.mrf.mxu0
    %223 = vmatprep.mubr.f32.mxu0 0.0
    %224 = vmatmul.mubr.f32.gmra.mxu0 %v60
    %v225 = vpop.f32.mrf.mxu0
    %v226 = vadd.f32 0.0, %v225
    %v227 = vpop.f32.mrf.mxu0
    %228 = vmatprep.mubr.f32.mxu0 0.0
    %229 = vmatmul.mubr.f32.gmra.mxu0 %v63
    %v230 = vpop.f32.mrf.mxu0
    %v231 = vadd.f32 0.0, %v230
    %v232 = vpop.f32.mrf.mxu0
    %233 = vmatprep.mubr.f32.mxu0 0.0
    %234 = vmatmul.mubr.f32.gmra.mxu0 %v66
    %v235 = vpop.f32.mrf.mxu0
    %v236 = vadd.f32 0.0, %v235
    %v237 = vpop.f32.mrf.mxu0
    %238 = vmatprep.mubr.f32.mxu0 0.0
    %239 = vmatmul.mubr.f32.gmra.mxu0 %v69
    %v240 = vpop.f32.mrf.mxu0
    %v241 = vadd.f32 0.0, %v240
    %v242 = vpop.f32.mrf.mxu0
    %243 = vmatprep.mubr.f32.mxu0 0.0
    %244 = vmatmul.mubr.f32.gmra.mxu0 %v72
    %v245 = vpop.f32.mrf.mxu0
    %v246 = vadd.f32 0.0, %v245
    %v247 = vpop.f32.mrf.mxu0
    %248 = vmatprep.mubr.f32.mxu0 0.0
    %249 = vmatmul.mubr.f32.gmra.mxu0 %v75
    %v250 = vpop.f32.mrf.mxu0
    %v251 = vadd.f32 0.0, %v250
    %v252 = vpop.f32.mrf.mxu0
    %253 = vmatprep.mubr.f32.mxu0 0.0
    %254 = vmatmul.mubr.f32.gmra.mxu0 %v78
    %v255 = vpop.f32.mrf.mxu0
    %v256 = vadd.f32 0.0, %v255
    %v257 = vpop.f32.mrf.mxu0
    %258 = vmatprep.mubr.f32.mxu0 0.0
    %259 = vmatmul.mubr.f32.gmra.mxu0 %v81
    %v260 = vpop.f32.mrf.mxu0
    %v261 = vadd.f32 0.0, %v260
    %v262 = vpop.f32.mrf.mxu0
    %263 = vmatprep.mubr.f32.mxu0 0.0
    %264 = vmatmul.mubr.f32.gmra.mxu0 %v84
    %v265 = vpop.f32.mrf.mxu0
    %v266 = vadd.f32 0.0, %v265
    %v267 = vpop.f32.mrf.mxu0
    %268 = vmatprep.mubr.f32.mxu0 0.0
    %269 = vmatmul.mubr.f32.gmra.mxu0 %v87
    %v270 = vpop.f32.mrf.mxu0
    %v271 = vadd.f32 0.0, %v270
    %v272 = vpop.f32.mrf.mxu0
    %273 = vmatprep.mubr.f32.mxu0 0.0
    %274 = vmatmul.mubr.f32.gmra.mxu0 %v90
    %v275 = vpop.f32.mrf.mxu0
    %v276 = vadd.f32 0.0, %v275
    %v277 = vpop.f32.mrf.mxu0
    %278 = vmatprep.mubr.f32.mxu0 0.0
    %279 = vmatmul.mubr.f32.gmra.mxu0 %v93
    %v280 = vpop.f32.mrf.mxu0
    %v281 = vadd.f32 0.0, %v280
    %v282 = vpop.f32.mrf.mxu0
    %283 = vmatprep.mubr.f32.mxu0 0.0
    %284 = vmatmul.mubr.f32.gmra.mxu0 %v96
    %v285 = vpop.f32.mrf.mxu0
    %v286 = vadd.f32 0.0, %v285
    %v287 = vpop.f32.mrf.mxu0
    %288 = vmatprep.mubr.f32.mxu0 0.0
    %289 = vmatmul.mubr.f32.gmra.mxu0 %v99
    %v290 = vpop.f32.mrf.mxu0
    %v291 = vadd.f32 0.0, %v290
    %v292 = vpop.f32.mrf.mxu0
    %293 = vdwg.mxu0
    %s294 = scalar_lea.vmem %s1, %s18
    %v295 = vld [vmem:[%s294] sm:$0xff]
    %v296 = vld [vmem:[%s294 + $0x8] sm:$0xff]
    %v297 = vld [vmem:[%s294 + $0x10] sm:$0xff]
    %v298 = vld [vmem:[%s294 + $0x18] sm:$0xff]
    %v299 = vld [vmem:[%s294 + $0x20] sm:$0xff]
    %v300 = vld [vmem:[%s294 + $0x28] sm:$0xff]
    %v301 = vld [vmem:[%s294 + $0x30] sm:$0xff]
    %v302 = vld [vmem:[%s294 + $0x38] sm:$0xff]
    %v303 = vld [vmem:[%s294 + $0x40] sm:$0xff]
    %v304 = vld [vmem:[%s294 + $0x48] sm:$0xff]
    %v305 = vld [vmem:[%s294 + $0x50] sm:$0xff]
    %v306 = vld [vmem:[%s294 + $0x58] sm:$0xff]
    %v307 = vld [vmem:[%s294 + $0x60] sm:$0xff]
    %v308 = vld [vmem:[%s294 + $0x68] sm:$0xff]
    %v309 = vld [vmem:[%s294 + $0x70] sm:$0xff]
    %v310 = vld [vmem:[%s294 + $0x78] sm:$0xff]
    %v311 = vld [vmem:[%s2] sm:$0x1]
    %s312 = scalar_lea.vmem %s3, %s18
    %v313 = vld [vmem:[%s312] sm:$0xff]
    %v314 = vld [vmem:[%s312 + $0x8] sm:$0xff]
    %v315 = vld [vmem:[%s312 + $0x10] sm:$0xff]
    %v316 = vld [vmem:[%s312 + $0x18] sm:$0xff]
    %v317 = vld [vmem:[%s312 + $0x20] sm:$0xff]
    %v318 = vld [vmem:[%s312 + $0x28] sm:$0xff]
    %v319 = vld [vmem:[%s312 + $0x30] sm:$0xff]
    %v320 = vld [vmem:[%s312 + $0x38] sm:$0xff]
    %v321 = vld [vmem:[%s312 + $0x40] sm:$0xff]
    %v322 = vld [vmem:[%s312 + $0x48] sm:$0xff]
    %v323 = vld [vmem:[%s312 + $0x50] sm:$0xff]
    %v324 = vld [vmem:[%s312 + $0x58] sm:$0xff]
    %v325 = vld [vmem:[%s312 + $0x60] sm:$0xff]
    %v326 = vld [vmem:[%s312 + $0x68] sm:$0xff]
    %v327 = vld [vmem:[%s312 + $0x70] sm:$0xff]
    %v328 = vld [vmem:[%s312 + $0x78] sm:$0xff]
    %329 = vset.pattern.permute.xlu0 0
    %330 = vperm.xlu0 %329, %v295
    %v331 = vpop.permute.xlu0 %330
    %332 = vset.pattern.permute.xlu0 0
    %333 = vperm.xlu0 %332, %v296
    %v334 = vpop.permute.xlu0 %333
    %335 = vset.pattern.permute.xlu0 0
    %336 = vperm.xlu0 %335, %v297
    %v337 = vpop.permute.xlu0 %336
    %338 = vset.pattern.permute.xlu0 0
    %339 = vperm.xlu0 %338, %v298
    %v340 = vpop.permute.xlu0 %339
    %341 = vset.pattern.permute.xlu0 0
    %342 = vperm.xlu0 %341, %v299
    %v343 = vpop.permute.xlu0 %342
    %344 = vset.pattern.permute.xlu0 0
    %345 = vperm.xlu0 %344, %v300
    %v346 = vpop.permute.xlu0 %345
    %347 = vset.pattern.permute.xlu0 0
    %348 = vperm.xlu0 %347, %v301
    %v349 = vpop.permute.xlu0 %348
    %350 = vset.pattern.permute.xlu0 0
    %351 = vperm.xlu0 %350, %v302
    %v352 = vpop.permute.xlu0 %351
    %353 = vset.pattern.permute.xlu0 0
    %354 = vperm.xlu0 %353, %v303
    %v355 = vpop.permute.xlu0 %354
    %356 = vset.pattern.permute.xlu0 0
    %357 = vperm.xlu0 %356, %v304
    %v358 = vpop.permute.xlu0 %357
    %359 = vset.pattern.permute.xlu0 0
    %360 = vperm.xlu0 %359, %v305
    %v361 = vpop.permute.xlu0 %360
    %362 = vset.pattern.permute.xlu0 0
    %363 = vperm.xlu0 %362, %v306
    %v364 = vpop.permute.xlu0 %363
    %365 = vset.pattern.permute.xlu0 0
    %366 = vperm.xlu0 %365, %v307
    %v367 = vpop.permute.xlu0 %366
    %368 = vset.pattern.permute.xlu0 0
    %369 = vperm.xlu0 %368, %v308
    %v370 = vpop.permute.xlu0 %369
    %371 = vset.pattern.permute.xlu0 0
    %372 = vperm.xlu0 %371, %v309
    %v373 = vpop.permute.xlu0 %372
    %374 = vset.pattern.permute.xlu0 0
    %375 = vperm.xlu0 %374, %v310
    %v376 = vpop.permute.xlu0 %375
    %v377 = vlaneseq
    %v378 = vshrl.u32 %v377, 7
    %v379 = vsub.s32 0, %v378
    %v380 = vrot.slane %v311, %v379
    %vm381 = vcmp.eq.s32.totalorder %v331, %v380
    %vm382 = vcmp.eq.s32.totalorder %v334, %v380
    %vm383 = vcmp.eq.s32.totalorder %v337, %v380
    %vm384 = vcmp.eq.s32.totalorder %v340, %v380
    %vm385 = vcmp.eq.s32.totalorder %v343, %v380
    %vm386 = vcmp.eq.s32.totalorder %v346, %v380
    %vm387 = vcmp.eq.s32.totalorder %v349, %v380
    %vm388 = vcmp.eq.s32.totalorder %v352, %v380
    %vm389 = vcmp.eq.s32.totalorder %v355, %v380
    %vm390 = vcmp.eq.s32.totalorder %v358, %v380
    %vm391 = vcmp.eq.s32.totalorder %v361, %v380
    %vm392 = vcmp.eq.s32.totalorder %v364, %v380
    %vm393 = vcmp.eq.s32.totalorder %v367, %v380
    %vm394 = vcmp.eq.s32.totalorder %v370, %v380
    %vm395 = vcmp.eq.s32.totalorder %v373, %v380
    %vm396 = vcmp.eq.s32.totalorder %v376, %v380
    %v397 = vlaneseq
    %v398 = vand.u32 %v397, 127
    %v399 = vlaneseq
    %v400 = vshrl.u32 %v399, 7
    %v401 = vadd.s32 %v400, 8
    %v402 = vadd.s32 %v400, 16
    %v403 = vadd.s32 %v400, 24
    %v404 = vadd.s32 %v400, 32
    %v405 = vadd.s32 %v400, 40
    %v406 = vadd.s32 %v400, 48
    %v407 = vadd.s32 %v400, 56
    %v408 = vadd.s32 %v400, 64
    %v409 = vadd.s32 %v400, 72
    %v410 = vadd.s32 %v400, 80
    %v411 = vadd.s32 %v400, 88
    %v412 = vadd.s32 %v400, 96
    %v413 = vadd.s32 %v400, 104
    %v414 = vadd.s32 %v400, 112
    %v415 = vadd.s32 %v400, 120
    %v416 = vstv %s18
    %v417 = vadd.s32 %v400, %v416
    %v418 = vadd.s32 %v401, %v416
    %v419 = vadd.s32 %v402, %v416
    %v420 = vadd.s32 %v403, %v416
    %v421 = vadd.s32 %v404, %v416
    %v422 = vadd.s32 %v405, %v416
    %v423 = vadd.s32 %v406, %v416
    %v424 = vadd.s32 %v407, %v416
    %v425 = vadd.s32 %v408, %v416
    %v426 = vadd.s32 %v409, %v416
    %v427 = vadd.s32 %v410, %v416
    %v428 = vadd.s32 %v411, %v416
    %v429 = vadd.s32 %v412, %v416
    %v430 = vadd.s32 %v413, %v416
    %v431 = vadd.s32 %v414, %v416
    %v432 = vadd.s32 %v415, %v416
    %vm433 = vcmp.ne.s32.totalorder %v398, %v417
    %vm434 = vcmp.ne.s32.totalorder %v398, %v418
    %vm435 = vcmp.ne.s32.totalorder %v398, %v419
    %vm436 = vcmp.ne.s32.totalorder %v398, %v420
    %vm437 = vcmp.ne.s32.totalorder %v398, %v421
    %vm438 = vcmp.ne.s32.totalorder %v398, %v422
    %vm439 = vcmp.ne.s32.totalorder %v398, %v423
    %vm440 = vcmp.ne.s32.totalorder %v398, %v424
    %vm441 = vcmp.ne.s32.totalorder %v398, %v425
    %vm442 = vcmp.ne.s32.totalorder %v398, %v426
    %vm443 = vcmp.ne.s32.totalorder %v398, %v427
    %vm444 = vcmp.ne.s32.totalorder %v398, %v428
    %vm445 = vcmp.ne.s32.totalorder %v398, %v429
    %vm446 = vcmp.ne.s32.totalorder %v398, %v430
    %vm447 = vcmp.ne.s32.totalorder %v398, %v431
    %vm448 = vcmp.ne.s32.totalorder %v398, %v432
    %vm449 = vmand %vm381, %vm433
    %vm450 = vmand %vm382, %vm434
    %vm451 = vmand %vm383, %vm435
    %vm452 = vmand %vm384, %vm436
    %vm453 = vmand %vm385, %vm437
    %vm454 = vmand %vm386, %vm438
    %vm455 = vmand %vm387, %vm439
    %vm456 = vmand %vm388, %vm440
    %vm457 = vmand %vm389, %vm441
    %vm458 = vmand %vm390, %vm442
    %vm459 = vmand %vm391, %vm443
    %vm460 = vmand %vm392, %vm444
    %vm461 = vmand %vm393, %vm445
    %vm462 = vmand %vm394, %vm446
    %vm463 = vmand %vm395, %vm447
    %vm464 = vmand %vm396, %vm448
    %vm465 = vcmp.lt.f32.partialorder %v216, 0.99999
    %vm466 = vcmp.lt.f32.partialorder %v221, 0.99999
    %vm467 = vcmp.lt.f32.partialorder %v226, 0.99999
    %vm468 = vcmp.lt.f32.partialorder %v231, 0.99999
    %vm469 = vcmp.lt.f32.partialorder %v236, 0.99999
    %vm470 = vcmp.lt.f32.partialorder %v241, 0.99999
    %vm471 = vcmp.lt.f32.partialorder %v246, 0.99999
    %vm472 = vcmp.lt.f32.partialorder %v251, 0.99999
    %vm473 = vcmp.lt.f32.partialorder %v256, 0.99999
    %vm474 = vcmp.lt.f32.partialorder %v261, 0.99999
    %vm475 = vcmp.lt.f32.partialorder %v266, 0.99999
    %vm476 = vcmp.lt.f32.partialorder %v271, 0.99999
    %vm477 = vcmp.lt.f32.partialorder %v276, 0.99999
    %vm478 = vcmp.lt.f32.partialorder %v281, 0.99999
    %vm479 = vcmp.lt.f32.partialorder %v286, 0.99999
    %vm480 = vcmp.lt.f32.partialorder %v291, 0.99999
    %vm481 = vmand %vm449, %vm465
    %vm482 = vmand %vm450, %vm466
    %vm483 = vmand %vm451, %vm467
    %vm484 = vmand %vm452, %vm468
    %vm485 = vmand %vm453, %vm469
    %vm486 = vmand %vm454, %vm470
    %vm487 = vmand %vm455, %vm471
    %vm488 = vmand %vm456, %vm472
    %vm489 = vmand %vm457, %vm473
    %vm490 = vmand %vm458, %vm474
    %vm491 = vmand %vm459, %vm475
    %vm492 = vmand %vm460, %vm476
    %vm493 = vmand %vm461, %vm477
    %vm494 = vmand %vm462, %vm478
    %vm495 = vmand %vm463, %vm479
    %vm496 = vmand %vm464, %vm480
    %vm497 = vmxor %vm381, 1
    %vm498 = vmxor %vm382, 1
    %vm499 = vmxor %vm383, 1
    %vm500 = vmxor %vm384, 1
    %vm501 = vmxor %vm385, 1
    %vm502 = vmxor %vm386, 1
    %vm503 = vmxor %vm387, 1
    %vm504 = vmxor %vm388, 1
    %vm505 = vmxor %vm389, 1
    %vm506 = vmxor %vm390, 1
    %vm507 = vmxor %vm391, 1
    %vm508 = vmxor %vm392, 1
    %vm509 = vmxor %vm393, 1
    %vm510 = vmxor %vm394, 1
    %vm511 = vmxor %vm395, 1
    %vm512 = vmxor %vm396, 1
    %vm513 = vcmp.lt.s32.totalorder %v398, 8
    %vm514 = vmand %vm497, %vm513
    %vm515 = vmand %vm498, %vm513
    %vm516 = vmand %vm499, %vm513
    %vm517 = vmand %vm500, %vm513
    %vm518 = vmand %vm501, %vm513
    %vm519 = vmand %vm502, %vm513
    %vm520 = vmand %vm503, %vm513
    %vm521 = vmand %vm504, %vm513
    %vm522 = vmand %vm505, %vm513
    %vm523 = vmand %vm506, %vm513
    %vm524 = vmand %vm507, %vm513
    %vm525 = vmand %vm508, %vm513
    %vm526 = vmand %vm509, %vm513
    %vm527 = vmand %vm510, %vm513
    %vm528 = vmand %vm511, %vm513
    %vm529 = vmand %vm512, %vm513
    %v530 = vsel %vm481, %v216, 1e+30
    %v531 = vsel %vm482, %v221, 1e+30
    %v532 = vsel %vm483, %v226, 1e+30
    %v533 = vsel %vm484, %v231, 1e+30
    %v534 = vsel %vm485, %v236, 1e+30
    %v535 = vsel %vm486, %v241, 1e+30
    %v536 = vsel %vm487, %v246, 1e+30
    %v537 = vsel %vm488, %v251, 1e+30
    %v538 = vsel %vm489, %v256, 1e+30
    %v539 = vsel %vm490, %v261, 1e+30
    %v540 = vsel %vm491, %v266, 1e+30
    %v541 = vsel %vm492, %v271, 1e+30
    %v542 = vsel %vm493, %v276, 1e+30
    %v543 = vsel %vm494, %v281, 1e+30
    %v544 = vsel %vm495, %v286, 1e+30
    %v545 = vsel %vm496, %v291, 1e+30
    %546 = vmin.xlane.f32.xlu0 %v530
    %v547 = vpop.xlane.xlu0 %546
    %548 = vmin.xlane.f32.xlu0 %v531
    %v549 = vpop.xlane.xlu0 %548
    %550 = vmin.xlane.f32.xlu0 %v532
    %v551 = vpop.xlane.xlu0 %550
    %552 = vmin.xlane.f32.xlu0 %v533
    %v553 = vpop.xlane.xlu0 %552
    %554 = vmin.xlane.f32.xlu0 %v534
    %v555 = vpop.xlane.xlu0 %554
    %556 = vmin.xlane.f32.xlu0 %v535
    %v557 = vpop.xlane.xlu0 %556
    %558 = vmin.xlane.f32.xlu0 %v536
    %v559 = vpop.xlane.xlu0 %558
    %560 = vmin.xlane.f32.xlu0 %v537
    %v561 = vpop.xlane.xlu0 %560
    %562 = vmin.xlane.f32.xlu0 %v538
    %v563 = vpop.xlane.xlu0 %562
    %564 = vmin.xlane.f32.xlu0 %v539
    %v565 = vpop.xlane.xlu0 %564
    %566 = vmin.xlane.f32.xlu0 %v540
    %v567 = vpop.xlane.xlu0 %566
    %568 = vmin.xlane.f32.xlu0 %v541
    %v569 = vpop.xlane.xlu0 %568
    %570 = vmin.xlane.f32.xlu0 %v542
    %v571 = vpop.xlane.xlu0 %570
    %572 = vmin.xlane.f32.xlu0 %v543
    %v573 = vpop.xlane.xlu0 %572
    %574 = vmin.xlane.f32.xlu0 %v544
    %v575 = vpop.xlane.xlu0 %574
    %576 = vmin.xlane.f32.xlu0 %v545
    %v577 = vpop.xlane.xlu0 %576
    %v578 = vsel %vm514, %v216, -1e+30
    %v579 = vsel %vm515, %v221, -1e+30
    %v580 = vsel %vm516, %v226, -1e+30
    %v581 = vsel %vm517, %v231, -1e+30
    %v582 = vsel %vm518, %v236, -1e+30
    %v583 = vsel %vm519, %v241, -1e+30
    %v584 = vsel %vm520, %v246, -1e+30
    %v585 = vsel %vm521, %v251, -1e+30
    %v586 = vsel %vm522, %v256, -1e+30
    %v587 = vsel %vm523, %v261, -1e+30
    %v588 = vsel %vm524, %v266, -1e+30
    %v589 = vsel %vm525, %v271, -1e+30
    %v590 = vsel %vm526, %v276, -1e+30
    %v591 = vsel %vm527, %v281, -1e+30
    %v592 = vsel %vm528, %v286, -1e+30
    %v593 = vsel %vm529, %v291, -1e+30
    %594 = vmax.xlane.f32.xlu0 %v578
    %v595 = vpop.xlane.xlu0 %594
    %596 = vmax.xlane.f32.xlu0 %v579
    %v597 = vpop.xlane.xlu0 %596
    %598 = vmax.xlane.f32.xlu0 %v580
    %v599 = vpop.xlane.xlu0 %598
    %600 = vmax.xlane.f32.xlu0 %v581
    %v601 = vpop.xlane.xlu0 %600
    %602 = vmax.xlane.f32.xlu0 %v582
    %v603 = vpop.xlane.xlu0 %602
    %604 = vmax.xlane.f32.xlu0 %v583
    %v605 = vpop.xlane.xlu0 %604
    %606 = vmax.xlane.f32.xlu0 %v584
    %v607 = vpop.xlane.xlu0 %606
    %608 = vmax.xlane.f32.xlu0 %v585
    %v609 = vpop.xlane.xlu0 %608
    %610 = vmax.xlane.f32.xlu0 %v586
    %v611 = vpop.xlane.xlu0 %610
    %612 = vmax.xlane.f32.xlu0 %v587
    %v613 = vpop.xlane.xlu0 %612
    %614 = vmax.xlane.f32.xlu0 %v588
    %v615 = vpop.xlane.xlu0 %614
    %616 = vmax.xlane.f32.xlu0 %v589
    %v617 = vpop.xlane.xlu0 %616
    %618 = vmax.xlane.f32.xlu0 %v590
    %v619 = vpop.xlane.xlu0 %618
    %620 = vmax.xlane.f32.xlu0 %v591
    %v621 = vpop.xlane.xlu0 %620
    %622 = vmax.xlane.f32.xlu0 %v592
    %v623 = vpop.xlane.xlu0 %622
    %624 = vmax.xlane.f32.xlu0 %v593
    %v625 = vpop.xlane.xlu0 %624
    %v626 = vadd.f32 %v216, 0.1
    %v627 = vadd.f32 %v221, 0.1
    %v628 = vadd.f32 %v226, 0.1
    %v629 = vadd.f32 %v231, 0.1
    %v630 = vadd.f32 %v236, 0.1
    %v631 = vadd.f32 %v241, 0.1
    %v632 = vadd.f32 %v246, 0.1
    %v633 = vadd.f32 %v251, 0.1
    %v634 = vadd.f32 %v256, 0.1
    %v635 = vadd.f32 %v261, 0.1
    %v636 = vadd.f32 %v266, 0.1
    %v637 = vadd.f32 %v271, 0.1
    %v638 = vadd.f32 %v276, 0.1
    %v639 = vadd.f32 %v281, 0.1
    %v640 = vadd.f32 %v286, 0.1
    %v641 = vadd.f32 %v291, 0.1
    %vm642 = vcmp.gt.f32.partialorder %v626, %v547
    %vm643 = vcmp.gt.f32.partialorder %v627, %v549
    %vm644 = vcmp.gt.f32.partialorder %v628, %v551
    %vm645 = vcmp.gt.f32.partialorder %v629, %v553
    %vm646 = vcmp.gt.f32.partialorder %v630, %v555
    %vm647 = vcmp.gt.f32.partialorder %v631, %v557
    %vm648 = vcmp.gt.f32.partialorder %v632, %v559
    %vm649 = vcmp.gt.f32.partialorder %v633, %v561
    %vm650 = vcmp.gt.f32.partialorder %v634, %v563
    %vm651 = vcmp.gt.f32.partialorder %v635, %v565
    %vm652 = vcmp.gt.f32.partialorder %v636, %v567
    %vm653 = vcmp.gt.f32.partialorder %v637, %v569
    %vm654 = vcmp.gt.f32.partialorder %v638, %v571
    %vm655 = vcmp.gt.f32.partialorder %v639, %v573
    %vm656 = vcmp.gt.f32.partialorder %v640, %v575
    %vm657 = vcmp.gt.f32.partialorder %v641, %v577
    %vm658 = vmand %vm514, %vm642
    %vm659 = vmand %vm515, %vm643
    %vm660 = vmand %vm516, %vm644
    %vm661 = vmand %vm517, %vm645
    %vm662 = vmand %vm518, %vm646
    %vm663 = vmand %vm519, %vm647
    %vm664 = vmand %vm520, %vm648
    %vm665 = vmand %vm521, %vm649
    %vm666 = vmand %vm522, %vm650
    %vm667 = vmand %vm523, %vm651
    %vm668 = vmand %vm524, %vm652
    %vm669 = vmand %vm525, %vm653
    %vm670 = vmand %vm526, %vm654
    %vm671 = vmand %vm527, %vm655
    %vm672 = vmand %vm528, %vm656
    %vm673 = vmand %vm529, %vm657
    %v674 = vsub.f32 %v216, 0.1
    %v675 = vsub.f32 %v221, 0.1
    %v676 = vsub.f32 %v226, 0.1
    %v677 = vsub.f32 %v231, 0.1
    %v678 = vsub.f32 %v236, 0.1
    %v679 = vsub.f32 %v241, 0.1
    %v680 = vsub.f32 %v246, 0.1
    %v681 = vsub.f32 %v251, 0.1
    %v682 = vsub.f32 %v256, 0.1
    %v683 = vsub.f32 %v261, 0.1
    %v684 = vsub.f32 %v266, 0.1
    %v685 = vsub.f32 %v271, 0.1
    %v686 = vsub.f32 %v276, 0.1
    %v687 = vsub.f32 %v281, 0.1
    %v688 = vsub.f32 %v286, 0.1
    %v689 = vsub.f32 %v291, 0.1
    %vm690 = vcmp.lt.f32.partialorder %v674, %v595
    %vm691 = vcmp.lt.f32.partialorder %v675, %v597
    %vm692 = vcmp.lt.f32.partialorder %v676, %v599
    %vm693 = vcmp.lt.f32.partialorder %v677, %v601
    %vm694 = vcmp.lt.f32.partialorder %v678, %v603
    %vm695 = vcmp.lt.f32.partialorder %v679, %v605
    %vm696 = vcmp.lt.f32.partialorder %v680, %v607
    %vm697 = vcmp.lt.f32.partialorder %v681, %v609
    %vm698 = vcmp.lt.f32.partialorder %v682, %v611
    %vm699 = vcmp.lt.f32.partialorder %v683, %v613
    %vm700 = vcmp.lt.f32.partialorder %v684, %v615
    %vm701 = vcmp.lt.f32.partialorder %v685, %v617
    %vm702 = vcmp.lt.f32.partialorder %v686, %v619
    %vm703 = vcmp.lt.f32.partialorder %v687, %v621
    %vm704 = vcmp.lt.f32.partialorder %v688, %v623
    %vm705 = vcmp.lt.f32.partialorder %v689, %v625
    %vm706 = vmand %vm481, %vm690
    %vm707 = vmand %vm482, %vm691
    %vm708 = vmand %vm483, %vm692
    %vm709 = vmand %vm484, %vm693
    %vm710 = vmand %vm485, %vm694
    %vm711 = vmand %vm486, %vm695
    %vm712 = vmand %vm487, %vm696
    %vm713 = vmand %vm488, %vm697
    %vm714 = vmand %vm489, %vm698
    %vm715 = vmand %vm490, %vm699
    %vm716 = vmand %vm491, %vm700
    %vm717 = vmand %vm492, %vm701
    %vm718 = vmand %vm493, %vm702
    %vm719 = vmand %vm494, %vm703
    %vm720 = vmand %vm495, %vm704
    %vm721 = vmand %vm496, %vm705
    %v722 = vsel %vm706, -2.0, 40.0
    %v723 = vsel %vm707, -2.0, 40.0
    %v724 = vsel %vm708, -2.0, 40.0
    %v725 = vsel %vm709, -2.0, 40.0
    %v726 = vsel %vm710, -2.0, 40.0
    %v727 = vsel %vm711, -2.0, 40.0
    %v728 = vsel %vm712, -2.0, 40.0
    %v729 = vsel %vm713, -2.0, 40.0
    %v730 = vsel %vm714, -2.0, 40.0
    %v731 = vsel %vm715, -2.0, 40.0
    %v732 = vsel %vm716, -2.0, 40.0
    %v733 = vsel %vm717, -2.0, 40.0
    %v734 = vsel %vm718, -2.0, 40.0
    %v735 = vsel %vm719, -2.0, 40.0
    %v736 = vsel %vm720, -2.0, 40.0
    %v737 = vsel %vm721, -2.0, 40.0
    %739 = vset.pattern.permute.xlu0 0
    %740 = vperm.xlu0 %739, %v313
    %v741 = vpop.permute.xlu0 %740
    %744 = vset.pattern.permute.xlu0 0
    %745 = vperm.xlu0 %744, %v314
    %v746 = vpop.permute.xlu0 %745
    %749 = vset.pattern.permute.xlu0 0
    %750 = vperm.xlu0 %749, %v315
    %v751 = vpop.permute.xlu0 %750
    %754 = vset.pattern.permute.xlu0 0
    %755 = vperm.xlu0 %754, %v316
    %v756 = vpop.permute.xlu0 %755
    %759 = vset.pattern.permute.xlu0 0
    %760 = vperm.xlu0 %759, %v317
    %v761 = vpop.permute.xlu0 %760
    %764 = vset.pattern.permute.xlu0 0
    %765 = vperm.xlu0 %764, %v318
    %v766 = vpop.permute.xlu0 %765
    %769 = vset.pattern.permute.xlu0 0
    %770 = vperm.xlu0 %769, %v319
    %v771 = vpop.permute.xlu0 %770
    %774 = vset.pattern.permute.xlu0 0
    %775 = vperm.xlu0 %774, %v320
    %v776 = vpop.permute.xlu0 %775
    %779 = vset.pattern.permute.xlu0 0
    %780 = vperm.xlu0 %779, %v321
    %v781 = vpop.permute.xlu0 %780
    %784 = vset.pattern.permute.xlu0 0
    %785 = vperm.xlu0 %784, %v322
    %v786 = vpop.permute.xlu0 %785
    %789 = vset.pattern.permute.xlu0 0
    %790 = vperm.xlu0 %789, %v323
    %v791 = vpop.permute.xlu0 %790
    %794 = vset.pattern.permute.xlu0 0
    %795 = vperm.xlu0 %794, %v324
    %v796 = vpop.permute.xlu0 %795
    %799 = vset.pattern.permute.xlu0 0
    %800 = vperm.xlu0 %799, %v325
    %v801 = vpop.permute.xlu0 %800
    %804 = vset.pattern.permute.xlu0 0
    %805 = vperm.xlu0 %804, %v326
    %v806 = vpop.permute.xlu0 %805
    %809 = vset.pattern.permute.xlu0 0
    %810 = vperm.xlu0 %809, %v327
    %v811 = vpop.permute.xlu0 %810
    %814 = vset.pattern.permute.xlu0 0
    %815 = vperm.xlu0 %814, %v328
    %v816 = vpop.permute.xlu0 %815
    %v818 = vsub.f32 %v216, %v741
    %v819 = vsub.f32 %v221, %v746
    %v820 = vsub.f32 %v226, %v751
    %v821 = vsub.f32 %v231, %v756
    %v822 = vsub.f32 %v236, %v761
    %v823 = vsub.f32 %v241, %v766
    %v824 = vsub.f32 %v246, %v771
    %v825 = vsub.f32 %v251, %v776
    %v826 = vsub.f32 %v256, %v781
    %v827 = vsub.f32 %v261, %v786
    %v828 = vsub.f32 %v266, %v791
    %v829 = vsub.f32 %v271, %v796
    %v830 = vsub.f32 %v276, %v801
    %v831 = vsub.f32 %v281, %v806
    %v832 = vsub.f32 %v286, %v811
    %v833 = vsub.f32 %v291, %v816
    %v834 = vmul.f32 %v722, %v818
    %v835 = vmul.f32 %v723, %v819
    %v836 = vmul.f32 %v724, %v820
    %v837 = vmul.f32 %v725, %v821
    %v838 = vmul.f32 %v726, %v822
    %v839 = vmul.f32 %v727, %v823
    %v840 = vmul.f32 %v728, %v824
    %v841 = vmul.f32 %v729, %v825
    %v842 = vmul.f32 %v730, %v826
    %v843 = vmul.f32 %v731, %v827
    %v844 = vmul.f32 %v732, %v828
    %v845 = vmul.f32 %v733, %v829
    %v846 = vmul.f32 %v734, %v830
    %v847 = vmul.f32 %v735, %v831
    %v848 = vmul.f32 %v736, %v832
    %v849 = vmul.f32 %v737, %v833
    %v850 = vmul.f32 %v834, 1.442695
    %v851 = vpow.pop %v850
    %v852 = vmul.f32 %v835, 1.442695
    %v853 = vpow.pop %v852
    %v854 = vmul.f32 %v836, 1.442695
    %v855 = vpow.pop %v854
    %v856 = vmul.f32 %v837, 1.442695
    %v857 = vpow.pop %v856
    %v858 = vmul.f32 %v838, 1.442695
    %v859 = vpow.pop %v858
    %v860 = vmul.f32 %v839, 1.442695
    %v861 = vpow.pop %v860
    %v862 = vmul.f32 %v840, 1.442695
    %v863 = vpow.pop %v862
    %v864 = vmul.f32 %v841, 1.442695
    %v865 = vpow.pop %v864
    %v866 = vmul.f32 %v842, 1.442695
    %v867 = vpow.pop %v866
    %v868 = vmul.f32 %v843, 1.442695
    %v869 = vpow.pop %v868
    %v870 = vmul.f32 %v844, 1.442695
    %v871 = vpow.pop %v870
    %v872 = vmul.f32 %v845, 1.442695
    %v873 = vpow.pop %v872
    %v874 = vmul.f32 %v846, 1.442695
    %v875 = vpow.pop %v874
    %v876 = vmul.f32 %v847, 1.442695
    %v877 = vpow.pop %v876
    %v878 = vmul.f32 %v848, 1.442695
    %v879 = vpow.pop %v878
    %v880 = vmul.f32 %v849, 1.442695
    %v881 = vpow.pop %v880
    %v882 = vsel %vm706, %v851, 0.0
    %v883 = vsel %vm707, %v853, 0.0
    %v884 = vsel %vm708, %v855, 0.0
    %v885 = vsel %vm709, %v857, 0.0
    %v886 = vsel %vm710, %v859, 0.0
    %v887 = vsel %vm711, %v861, 0.0
    %v888 = vsel %vm712, %v863, 0.0
    %v889 = vsel %vm713, %v865, 0.0
    %v890 = vsel %vm714, %v867, 0.0
    %v891 = vsel %vm715, %v869, 0.0
    %v892 = vsel %vm716, %v871, 0.0
    %v893 = vsel %vm717, %v873, 0.0
    %v894 = vsel %vm718, %v875, 0.0
    %v895 = vsel %vm719, %v877, 0.0
    %v896 = vsel %vm720, %v879, 0.0
    %v897 = vsel %vm721, %v881, 0.0
    %898 = vadd.xlane.f32.xlu0 %v882
    %v899 = vpop.xlane.xlu0 %898
    %900 = vadd.xlane.f32.xlu0 %v883
    %v901 = vpop.xlane.xlu0 %900
    %902 = vadd.xlane.f32.xlu0 %v884
    %v903 = vpop.xlane.xlu0 %902
    %904 = vadd.xlane.f32.xlu0 %v885
    %v905 = vpop.xlane.xlu0 %904
    %906 = vadd.xlane.f32.xlu0 %v886
    %v907 = vpop.xlane.xlu0 %906
    %908 = vadd.xlane.f32.xlu0 %v887
    %v909 = vpop.xlane.xlu0 %908
    %910 = vadd.xlane.f32.xlu0 %v888
    %v911 = vpop.xlane.xlu0 %910
    %912 = vadd.xlane.f32.xlu0 %v889
    %v913 = vpop.xlane.xlu0 %912
    %914 = vadd.xlane.f32.xlu0 %v890
    %v915 = vpop.xlane.xlu0 %914
    %916 = vadd.xlane.f32.xlu0 %v891
    %v917 = vpop.xlane.xlu0 %916
    %918 = vadd.xlane.f32.xlu0 %v892
    %v919 = vpop.xlane.xlu0 %918
    %920 = vadd.xlane.f32.xlu0 %v893
    %v921 = vpop.xlane.xlu0 %920
    %922 = vadd.xlane.f32.xlu0 %v894
    %v923 = vpop.xlane.xlu0 %922
    %924 = vadd.xlane.f32.xlu0 %v895
    %v925 = vpop.xlane.xlu0 %924
    %926 = vadd.xlane.f32.xlu0 %v896
    %v927 = vpop.xlane.xlu0 %926
    %928 = vadd.xlane.f32.xlu0 %v897
    %v929 = vpop.xlane.xlu0 %928
    %v930 = vsel %vm658, %v851, 0.0
    %v931 = vsel %vm659, %v853, 0.0
    %v932 = vsel %vm660, %v855, 0.0
    %v933 = vsel %vm661, %v857, 0.0
    %v934 = vsel %vm662, %v859, 0.0
    %v935 = vsel %vm663, %v861, 0.0
    %v936 = vsel %vm664, %v863, 0.0
    %v937 = vsel %vm665, %v865, 0.0
    %v938 = vsel %vm666, %v867, 0.0
    %v939 = vsel %vm667, %v869, 0.0
    %v940 = vsel %vm668, %v871, 0.0
    %v941 = vsel %vm669, %v873, 0.0
    %v942 = vsel %vm670, %v875, 0.0
    %v943 = vsel %vm671, %v877, 0.0
    %v944 = vsel %vm672, %v879, 0.0
    %v945 = vsel %vm673, %v881, 0.0
    %946 = vadd.xlane.f32.xlu0 %v930
    %v947 = vpop.xlane.xlu0 %946
    %948 = vadd.xlane.f32.xlu0 %v931
    %v949 = vpop.xlane.xlu0 %948
    %950 = vadd.xlane.f32.xlu0 %v932
    %v951 = vpop.xlane.xlu0 %950
    %952 = vadd.xlane.f32.xlu0 %v933
    %v953 = vpop.xlane.xlu0 %952
    %954 = vadd.xlane.f32.xlu0 %v934
    %v955 = vpop.xlane.xlu0 %954
    %956 = vadd.xlane.f32.xlu0 %v935
    %v957 = vpop.xlane.xlu0 %956
    %958 = vadd.xlane.f32.xlu0 %v936
    %v959 = vpop.xlane.xlu0 %958
    %960 = vadd.xlane.f32.xlu0 %v937
    %v961 = vpop.xlane.xlu0 %960
    %962 = vadd.xlane.f32.xlu0 %v938
    %v963 = vpop.xlane.xlu0 %962
    %964 = vadd.xlane.f32.xlu0 %v939
    %v965 = vpop.xlane.xlu0 %964
    %966 = vadd.xlane.f32.xlu0 %v940
    %v967 = vpop.xlane.xlu0 %966
    %968 = vadd.xlane.f32.xlu0 %v941
    %v969 = vpop.xlane.xlu0 %968
    %970 = vadd.xlane.f32.xlu0 %v942
    %v971 = vpop.xlane.xlu0 %970
    %972 = vadd.xlane.f32.xlu0 %v943
    %v973 = vpop.xlane.xlu0 %972
    %974 = vadd.xlane.f32.xlu0 %v944
    %v975 = vpop.xlane.xlu0 %974
    %976 = vadd.xlane.f32.xlu0 %v945
    %v977 = vpop.xlane.xlu0 %976
    %vm978 = vcmp.lt.s32.totalorder %v417, 8
    %vm979 = vcmp.lt.s32.totalorder %v418, 8
    %vm980 = vcmp.lt.s32.totalorder %v419, 8
    %vm981 = vcmp.lt.s32.totalorder %v420, 8
    %vm982 = vcmp.lt.s32.totalorder %v421, 8
    %vm983 = vcmp.lt.s32.totalorder %v422, 8
    %vm984 = vcmp.lt.s32.totalorder %v423, 8
    %vm985 = vcmp.lt.s32.totalorder %v424, 8
    %vm986 = vcmp.lt.s32.totalorder %v425, 8
    %vm987 = vcmp.lt.s32.totalorder %v426, 8
    %vm988 = vcmp.lt.s32.totalorder %v427, 8
    %vm989 = vcmp.lt.s32.totalorder %v428, 8
    %vm990 = vcmp.lt.s32.totalorder %v429, 8
    %vm991 = vcmp.lt.s32.totalorder %v430, 8
    %vm992 = vcmp.lt.s32.totalorder %v431, 8
    %vm993 = vcmp.lt.s32.totalorder %v432, 8
    %vm994 = vcmp.gt.f32.partialorder %v899, 0.0
    %vm995 = vcmp.gt.f32.partialorder %v901, 0.0
    %vm996 = vcmp.gt.f32.partialorder %v903, 0.0
    %vm997 = vcmp.gt.f32.partialorder %v905, 0.0
    %vm998 = vcmp.gt.f32.partialorder %v907, 0.0
    %vm999 = vcmp.gt.f32.partialorder %v909, 0.0
    %vm1000 = vcmp.gt.f32.partialorder %v911, 0.0
    %vm1001 = vcmp.gt.f32.partialorder %v913, 0.0
    %vm1002 = vcmp.gt.f32.partialorder %v915, 0.0
    %vm1003 = vcmp.gt.f32.partialorder %v917, 0.0
    %vm1004 = vcmp.gt.f32.partialorder %v919, 0.0
    %vm1005 = vcmp.gt.f32.partialorder %v921, 0.0
    %vm1006 = vcmp.gt.f32.partialorder %v923, 0.0
    %vm1007 = vcmp.gt.f32.partialorder %v925, 0.0
    %vm1008 = vcmp.gt.f32.partialorder %v927, 0.0
    %vm1009 = vcmp.gt.f32.partialorder %v929, 0.0
    %vm1010 = vcmp.gt.f32.partialorder %v947, 0.0
    %vm1011 = vcmp.gt.f32.partialorder %v949, 0.0
    %vm1012 = vcmp.gt.f32.partialorder %v951, 0.0
    %vm1013 = vcmp.gt.f32.partialorder %v953, 0.0
    %vm1014 = vcmp.gt.f32.partialorder %v955, 0.0
    %vm1015 = vcmp.gt.f32.partialorder %v957, 0.0
    %vm1016 = vcmp.gt.f32.partialorder %v959, 0.0
    %vm1017 = vcmp.gt.f32.partialorder %v961, 0.0
    %vm1018 = vcmp.gt.f32.partialorder %v963, 0.0
    %vm1019 = vcmp.gt.f32.partialorder %v965, 0.0
    %vm1020 = vcmp.gt.f32.partialorder %v967, 0.0
    %vm1021 = vcmp.gt.f32.partialorder %v969, 0.0
    %vm1022 = vcmp.gt.f32.partialorder %v971, 0.0
    %vm1023 = vcmp.gt.f32.partialorder %v973, 0.0
    %vm1024 = vcmp.gt.f32.partialorder %v975, 0.0
    %vm1025 = vcmp.gt.f32.partialorder %v977, 0.0
    %vm1026 = vmand %vm994, %vm1010
    %vm1027 = vmand %vm995, %vm1011
    %vm1028 = vmand %vm996, %vm1012
    %vm1029 = vmand %vm997, %vm1013
    %vm1030 = vmand %vm998, %vm1014
    %vm1031 = vmand %vm999, %vm1015
    %vm1032 = vmand %vm1000, %vm1016
    %vm1033 = vmand %vm1001, %vm1017
    %vm1034 = vmand %vm1002, %vm1018
    %vm1035 = vmand %vm1003, %vm1019
    %vm1036 = vmand %vm1004, %vm1020
    %vm1037 = vmand %vm1005, %vm1021
    %vm1038 = vmand %vm1006, %vm1022
    %vm1039 = vmand %vm1007, %vm1023
    %vm1040 = vmand %vm1008, %vm1024
    %vm1041 = vmand %vm1009, %vm1025
    %vm1042 = vmand %vm1026, %vm978
    %vm1043 = vmand %vm1027, %vm979
    %vm1044 = vmand %vm1028, %vm980
    %vm1045 = vmand %vm1029, %vm981
    %vm1046 = vmand %vm1030, %vm982
    %vm1047 = vmand %vm1031, %vm983
    %vm1048 = vmand %vm1032, %vm984
    %vm1049 = vmand %vm1033, %vm985
    %vm1050 = vmand %vm1034, %vm986
    %vm1051 = vmand %vm1035, %vm987
    %vm1052 = vmand %vm1036, %vm988
    %vm1053 = vmand %vm1037, %vm989
    %vm1054 = vmand %vm1038, %vm990
    %vm1055 = vmand %vm1039, %vm991
    %vm1056 = vmand %vm1040, %vm992
    %vm1057 = vmand %vm1041, %vm993
    %v1058 = vadd.f32 %v899, 1.0
    %v1059 = vadd.f32 %v901, 1.0
    %v1060 = vadd.f32 %v903, 1.0
    %v1061 = vadd.f32 %v905, 1.0
    %v1062 = vadd.f32 %v907, 1.0
    %v1063 = vadd.f32 %v909, 1.0
    %v1064 = vadd.f32 %v911, 1.0
    %v1065 = vadd.f32 %v913, 1.0
    %v1066 = vadd.f32 %v915, 1.0
    %v1067 = vadd.f32 %v917, 1.0
    %v1068 = vadd.f32 %v919, 1.0
    %v1069 = vadd.f32 %v921, 1.0
    %v1070 = vadd.f32 %v923, 1.0
    %v1071 = vadd.f32 %v925, 1.0
    %v1072 = vadd.f32 %v927, 1.0
    %v1073 = vadd.f32 %v929, 1.0
    %v1074 = vlog2.pop %v1058
    %v1075 = vmul.f32 %v1074, 0.6931472
    %v1076 = vlog2.pop %v1059
    %v1077 = vmul.f32 %v1076, 0.6931472
    %v1078 = vlog2.pop %v1060
    %v1079 = vmul.f32 %v1078, 0.6931472
    %v1080 = vlog2.pop %v1061
    %v1081 = vmul.f32 %v1080, 0.6931472
    %v1082 = vlog2.pop %v1062
    %v1083 = vmul.f32 %v1082, 0.6931472
    %v1084 = vlog2.pop %v1063
    %v1085 = vmul.f32 %v1084, 0.6931472
    %v1086 = vlog2.pop %v1064
    %v1087 = vmul.f32 %v1086, 0.6931472
    %v1088 = vlog2.pop %v1065
    %v1089 = vmul.f32 %v1088, 0.6931472
    %v1090 = vlog2.pop %v1066
    %v1091 = vmul.f32 %v1090, 0.6931472
    %v1092 = vlog2.pop %v1067
    %v1093 = vmul.f32 %v1092, 0.6931472
    %v1094 = vlog2.pop %v1068
    %v1095 = vmul.f32 %v1094, 0.6931472
    %v1096 = vlog2.pop %v1069
    %v1097 = vmul.f32 %v1096, 0.6931472
    %v1098 = vlog2.pop %v1070
    %v1099 = vmul.f32 %v1098, 0.6931472
    %v1100 = vlog2.pop %v1071
    %v1101 = vmul.f32 %v1100, 0.6931472
    %v1102 = vlog2.pop %v1072
    %v1103 = vmul.f32 %v1102, 0.6931472
    %v1104 = vlog2.pop %v1073
    %v1105 = vmul.f32 %v1104, 0.6931472
    %v1106 = vmul.f32 %v1075, 0.5
    %v1107 = vmul.f32 %v1077, 0.5
    %v1108 = vmul.f32 %v1079, 0.5
    %v1109 = vmul.f32 %v1081, 0.5
    %v1110 = vmul.f32 %v1083, 0.5
    %v1111 = vmul.f32 %v1085, 0.5
    %v1112 = vmul.f32 %v1087, 0.5
    %v1113 = vmul.f32 %v1089, 0.5
    %v1114 = vmul.f32 %v1091, 0.5
    %v1115 = vmul.f32 %v1093, 0.5
    %v1116 = vmul.f32 %v1095, 0.5
    %v1117 = vmul.f32 %v1097, 0.5
    %v1118 = vmul.f32 %v1099, 0.5
    %v1119 = vmul.f32 %v1101, 0.5
    %v1120 = vmul.f32 %v1103, 0.5
    %v1121 = vmul.f32 %v1105, 0.5
    %v1122 = vadd.f32 %v947, 1.0
    %v1123 = vadd.f32 %v949, 1.0
    %v1124 = vadd.f32 %v951, 1.0
    %v1125 = vadd.f32 %v953, 1.0
    %v1126 = vadd.f32 %v955, 1.0
    %v1127 = vadd.f32 %v957, 1.0
    %v1128 = vadd.f32 %v959, 1.0
    %v1129 = vadd.f32 %v961, 1.0
    %v1130 = vadd.f32 %v963, 1.0
    %v1131 = vadd.f32 %v965, 1.0
    %v1132 = vadd.f32 %v967, 1.0
    %v1133 = vadd.f32 %v969, 1.0
    %v1134 = vadd.f32 %v971, 1.0
    %v1135 = vadd.f32 %v973, 1.0
    %v1136 = vadd.f32 %v975, 1.0
    %v1137 = vadd.f32 %v977, 1.0
    %v1138 = vlog2.pop %v1122
    %v1139 = vmul.f32 %v1138, 0.6931472
    %v1140 = vlog2.pop %v1123
    %v1141 = vmul.f32 %v1140, 0.6931472
    %v1142 = vlog2.pop %v1124
    %v1143 = vmul.f32 %v1142, 0.6931472
    %v1144 = vlog2.pop %v1125
    %v1145 = vmul.f32 %v1144, 0.6931472
    %v1146 = vlog2.pop %v1126
    %v1147 = vmul.f32 %v1146, 0.6931472
    %v1148 = vlog2.pop %v1127
    %v1149 = vmul.f32 %v1148, 0.6931472
    %v1150 = vlog2.pop %v1128
    %v1151 = vmul.f32 %v1150, 0.6931472
    %v1152 = vlog2.pop %v1129
    %v1153 = vmul.f32 %v1152, 0.6931472
    %v1154 = vlog2.pop %v1130
    %v1155 = vmul.f32 %v1154, 0.6931472
    %v1156 = vlog2.pop %v1131
    %v1157 = vmul.f32 %v1156, 0.6931472
    %v1158 = vlog2.pop %v1132
    %v1159 = vmul.f32 %v1158, 0.6931472
    %v1160 = vlog2.pop %v1133
    %v1161 = vmul.f32 %v1160, 0.6931472
    %v1162 = vlog2.pop %v1134
    %v1163 = vmul.f32 %v1162, 0.6931472
    %v1164 = vlog2.pop %v1135
    %v1165 = vmul.f32 %v1164, 0.6931472
    %v1166 = vlog2.pop %v1136
    %v1167 = vmul.f32 %v1166, 0.6931472
    %v1168 = vlog2.pop %v1137
    %v1169 = vmul.f32 %v1168, 0.6931472
    %v1170 = vmul.f32 %v1139, 0.025
    %v1171 = vmul.f32 %v1141, 0.025
    %v1172 = vmul.f32 %v1143, 0.025
    %v1173 = vmul.f32 %v1145, 0.025
    %v1174 = vmul.f32 %v1147, 0.025
    %v1175 = vmul.f32 %v1149, 0.025
    %v1176 = vmul.f32 %v1151, 0.025
    %v1177 = vmul.f32 %v1153, 0.025
    %v1178 = vmul.f32 %v1155, 0.025
    %v1179 = vmul.f32 %v1157, 0.025
    %v1180 = vmul.f32 %v1159, 0.025
    %v1181 = vmul.f32 %v1161, 0.025
    %v1182 = vmul.f32 %v1163, 0.025
    %v1183 = vmul.f32 %v1165, 0.025
    %v1184 = vmul.f32 %v1167, 0.025
    %v1185 = vmul.f32 %v1169, 0.025
    %v1186 = vadd.f32 %v1106, %v1170
    %v1187 = vadd.f32 %v1107, %v1171
    %v1188 = vadd.f32 %v1108, %v1172
    %v1189 = vadd.f32 %v1109, %v1173
    %v1190 = vadd.f32 %v1110, %v1174
    %v1191 = vadd.f32 %v1111, %v1175
    %v1192 = vadd.f32 %v1112, %v1176
    %v1193 = vadd.f32 %v1113, %v1177
    %v1194 = vadd.f32 %v1114, %v1178
    %v1195 = vadd.f32 %v1115, %v1179
    %v1196 = vadd.f32 %v1116, %v1180
    %v1197 = vadd.f32 %v1117, %v1181
    %v1198 = vadd.f32 %v1118, %v1182
    %v1199 = vadd.f32 %v1119, %v1183
    %v1200 = vadd.f32 %v1120, %v1184
    %v1201 = vadd.f32 %v1121, %v1185
    %v1202 = vsel %vm1042, %v1186, 0.0
    %v1203 = vsel %vm1043, %v1187, 0.0
    %v1204 = vsel %vm1044, %v1188, 0.0
    %v1205 = vsel %vm1045, %v1189, 0.0
    %v1206 = vsel %vm1046, %v1190, 0.0
    %v1207 = vsel %vm1047, %v1191, 0.0
    %v1208 = vsel %vm1048, %v1192, 0.0
    %v1209 = vsel %vm1049, %v1193, 0.0
    %v1210 = vsel %vm1050, %v1194, 0.0
    %v1211 = vsel %vm1051, %v1195, 0.0
    %v1212 = vsel %vm1052, %v1196, 0.0
    %v1213 = vsel %vm1053, %v1197, 0.0
    %v1214 = vsel %vm1054, %v1198, 0.0
    %v1215 = vsel %vm1055, %v1199, 0.0
    %v1216 = vsel %vm1056, %v1200, 0.0
    %v1217 = vsel %vm1057, %v1201, 0.0
    %vm1218 = vcmask 7168
    %v1219 = vsel %vm1218, %v1202, 0.0
    %v1220 = vsel %vm1218, %v1203, 0.0
    %v1221 = vadd.f32 %v1219, %v1220
    %v1222 = vsel %vm1218, %v1204, 0.0
    %v1223 = vadd.f32 %v1221, %v1222
    %v1224 = vsel %vm1218, %v1205, 0.0
    %v1225 = vadd.f32 %v1223, %v1224
    %v1226 = vsel %vm1218, %v1206, 0.0
    %v1227 = vadd.f32 %v1225, %v1226
    %v1228 = vsel %vm1218, %v1207, 0.0
    %v1229 = vadd.f32 %v1227, %v1228
    %v1230 = vsel %vm1218, %v1208, 0.0
    %v1231 = vadd.f32 %v1229, %v1230
    %v1232 = vsel %vm1218, %v1209, 0.0
    %v1233 = vadd.f32 %v1231, %v1232
    %v1234 = vsel %vm1218, %v1210, 0.0
    %v1235 = vadd.f32 %v1233, %v1234
    %v1236 = vsel %vm1218, %v1211, 0.0
    %v1237 = vadd.f32 %v1235, %v1236
    %v1238 = vsel %vm1218, %v1212, 0.0
    %v1239 = vadd.f32 %v1237, %v1238
    %v1240 = vsel %vm1218, %v1213, 0.0
    %v1241 = vadd.f32 %v1239, %v1240
    %v1242 = vsel %vm1218, %v1214, 0.0
    %v1243 = vadd.f32 %v1241, %v1242
    %v1244 = vsel %vm1218, %v1215, 0.0
    %v1245 = vadd.f32 %v1243, %v1244
    %v1246 = vsel %vm1218, %v1216, 0.0
    %v1247 = vadd.f32 %v1245, %v1246
    %v1248 = vsel %vm1218, %v1217, 0.0
    %v1249 = vadd.f32 %v1247, %v1248
    %1250 = vadd.xlane.f32.xlu0 %v1249
    %v1251 = vpop.xlane.xlu0 %1250
    %v1252 = vrot.slane %v1251, 4
    %v1253 = vadd.f32 %v1251, %v1252
    %v1254 = vrot.slane %v1253, 2
    %v1255 = vadd.f32 %v1253, %v1254
    %v1256 = vrot.slane %v1255, 1
    %v1257 = vadd.f32 %v1255, %v1256
    %s1258 = vtos %v1257
    %v1259 = vstv %s1258
    %1260 = vst [vmem:[#allocation2] sm:$0xff] %v1259
    // Predicated region
    $region18: #{tpu_custom_call.1} parent=1 // pred_check
      _
    $region19: #{tpu_custom_call.1} parent=1 // pred_check_branch
      %1262 = sbr.rel (0) target = $region21
    $region20: #{tpu_custom_call.1} parent=1 // pred_region
      %s1264 = ssub.s32 128, 128
      %1265 = vsyncadd [#allocation3], %s1264
      %s1267 = sshll.u32 [#allocation2], 4
      %s1268 = int_to_ptr.vmem [resolvable:$true] %s1267
      %1270 = dma.vmem_to_hbm [thread:$0]  %s1268, 128, %s4, [#allocation3]
    $region21: #{tpu_custom_call.1} parent=1 // pred_fallthru
      _
    // Predicated region
    $region22: #{tpu_custom_call.1} parent=1 // pred_check
      _
    $region23: #{tpu_custom_call.1} parent=1 // pred_check_branch
      %1272 = sbr.rel (0) target = $region25
    $region24: #{tpu_custom_call.1} parent=1 // pred_region
      %1273 = dma.done [#allocation3], 128
    $region25: #{tpu_custom_call.1} parent=1 // pred_fallthru
      _
    %1274 = vsyncpa [#allocation3], 1

// kernel: tpu_custom_call.1
$region0: #{tpu_custom_call.1}
  #allocation0 [shape = 'u32[]', space=smem, size = 0x4, offset = 0x4, fixed_abs, tag = 'smem constant byte address 0x4 - core index']
  #allocation1 [shape = 'u32[144,128]{1,0:T(1,128)}', space=vmem, size = 0x12000, scoped, tag = 'internal scratch']
  %s0 = inlined_call_operand.vmem [shape: f32[128,32], index: 0, kind: input, shape index: {}]
  %s1 = inlined_call_operand.vmem [shape: s32[128,1], index: 1, kind: input, shape index: {}]
  %s2 = inlined_call_operand.vmem [shape: s32[1,128], index: 2, kind: input, shape index: {}]
  %s3 = inlined_call_operand.vmem [shape: f32[128,1], index: 3, kind: input, shape index: {}]
  %s4 = inlined_call_operand.hbm [shape: f32[8,128], index: 4, kind: output, shape index: {}]
  %s5 = sld [smem:[#allocation0]]
  $region26: #{tpu_custom_call.1} parent=0
    _
  %s7 = ssub.s32 1, %s5
  %s8 = scalar_select 0, %s7, %s5
  $region1: #{tpu_custom_call.1} parent=0
    #allocation2 [shape = 'u8[4096]{0}', space=vmem, size = 0x1000, scoped, tag = 'output window, operand 0, single buffered']
    #allocation3 [shape = 's32[1]{0}', space=sflag, size = 0x4, scoped, tag = 'scoped memory for tpu_custom_call.1']
    %9 = vsyncpa [#allocation3], 0
    // Predicated region
    $region2: #{tpu_custom_call.1} parent=1 // pred_check
      _
    $region3: #{tpu_custom_call.1} parent=1 // pred_check_branch
      %11 = sbr.rel (0) target = $region5
    $region4: #{tpu_custom_call.1} parent=1 // pred_region
      _
    $region5: #{tpu_custom_call.1} parent=1 // pred_fallthru
      _
    // Predicated region
    $region6: #{tpu_custom_call.1} parent=1 // pred_check
      _
    $region7: #{tpu_custom_call.1} parent=1 // pred_check_branch
      %13 = sbr.rel (0) target = $region9
    $region8: #{tpu_custom_call.1} parent=1 // pred_region
      _
    $region9: #{tpu_custom_call.1} parent=1 // pred_fallthru
      _
    // Predicated region
    $region10: #{tpu_custom_call.1} parent=1 // pred_check
      _
    $region11: #{tpu_custom_call.1} parent=1 // pred_check_branch
      %15 = sbr.rel (0) target = $region13
    $region12: #{tpu_custom_call.1} parent=1 // pred_region
      _
    $region13: #{tpu_custom_call.1} parent=1 // pred_fallthru
      _
    // Predicated region
    $region14: #{tpu_custom_call.1} parent=1 // pred_check
      _
    $region15: #{tpu_custom_call.1} parent=1 // pred_check_branch
      %17 = sbr.rel (0) target = $region17
    $region16: #{tpu_custom_call.1} parent=1 // pred_region
      _
    $region17: #{tpu_custom_call.1} parent=1 // pred_fallthru
      _
    %s18 = smul.u32 0, 128
    %s19 = scalar_lea.vmem %s0, %s18
    %v20 = vld [vmem:[%s19] sm:$0xff]
    %v21 = vld [vmem:[%s19 + $0x8] sm:$0xff]
    %v22 = vld [vmem:[%s19 + $0x10] sm:$0xff]
    %v23 = vld [vmem:[%s19 + $0x18] sm:$0xff]
    %v24 = vld [vmem:[%s19 + $0x20] sm:$0xff]
    %v25 = vld [vmem:[%s19 + $0x28] sm:$0xff]
    %v26 = vld [vmem:[%s19 + $0x30] sm:$0xff]
    %v27 = vld [vmem:[%s19 + $0x38] sm:$0xff]
    %v28 = vld [vmem:[%s19 + $0x40] sm:$0xff]
    %v29 = vld [vmem:[%s19 + $0x48] sm:$0xff]
    %v30 = vld [vmem:[%s19 + $0x50] sm:$0xff]
    %v31 = vld [vmem:[%s19 + $0x58] sm:$0xff]
    %v32 = vld [vmem:[%s19 + $0x60] sm:$0xff]
    %v33 = vld [vmem:[%s19 + $0x68] sm:$0xff]
    %v34 = vld [vmem:[%s19 + $0x70] sm:$0xff]
    %v35 = vld [vmem:[%s19 + $0x78] sm:$0xff]
    %v36 = vld [vmem:[%s0] sm:$0xff]
    %v37 = vld [vmem:[%s0 + $0x8] sm:$0xff]
    %v38 = vld [vmem:[%s0 + $0x10] sm:$0xff]
    %v39 = vld [vmem:[%s0 + $0x18] sm:$0xff]
    %v40 = vld [vmem:[%s0 + $0x20] sm:$0xff]
    %v41 = vld [vmem:[%s0 + $0x28] sm:$0xff]
    %v42 = vld [vmem:[%s0 + $0x30] sm:$0xff]
    %v43 = vld [vmem:[%s0 + $0x38] sm:$0xff]
    %v44 = vld [vmem:[%s0 + $0x40] sm:$0xff]
    %v45 = vld [vmem:[%s0 + $0x48] sm:$0xff]
    %v46 = vld [vmem:[%s0 + $0x50] sm:$0xff]
    %v47 = vld [vmem:[%s0 + $0x58] sm:$0xff]
    %v48 = vld [vmem:[%s0 + $0x60] sm:$0xff]
    %v49 = vld [vmem:[%s0 + $0x68] sm:$0xff]
    %v50 = vld [vmem:[%s0 + $0x70] sm:$0xff]
    %v51 = vld [vmem:[%s0 + $0x78] sm:$0xff]
    %vm52 = vcmask 261120
    %v54 = vsel %vm52, %v20, 0
    %v57 = vsel %vm52, %v21, 0
    %v60 = vsel %vm52, %v22, 0
    %v63 = vsel %vm52, %v23, 0
    %v66 = vsel %vm52, %v24, 0
    %v69 = vsel %vm52, %v25, 0
    %v72 = vsel %vm52, %v26, 0
    %v75 = vsel %vm52, %v27, 0
    %v78 = vsel %vm52, %v28, 0
    %v81 = vsel %vm52, %v29, 0
    %v84 = vsel %vm52, %v30, 0
    %v87 = vsel %vm52, %v31, 0
    %v90 = vsel %vm52, %v32, 0
    %v93 = vsel %vm52, %v33, 0
    %v96 = vsel %vm52, %v34, 0
    %v99 = vsel %vm52, %v35, 0
    %v102 = vsel %vm52, %v36, 0
    %v105 = vsel %vm52, %v37, 0
    %v108 = vsel %vm52, %v38, 0
    %v111 = vsel %vm52, %v39, 0
    %v114 = vsel %vm52, %v40, 0
    %v117 = vsel %vm52, %v41, 0
    %v120 = vsel %vm52, %v42, 0
    %v123 = vsel %vm52, %v43, 0
    %v126 = vsel %vm52, %v44, 0
    %v129 = vsel %vm52, %v45, 0
    %v132 = vsel %vm52, %v46, 0
    %v135 = vsel %vm52, %v47, 0
    %v138 = vsel %vm52, %v48, 0
    %v141 = vsel %vm52, %v49, 0
    %v144 = vsel %vm52, %v50, 0
    %v147 = vsel %vm52, %v51, 0
    %149 = vmatprep.subr.mxu0 0.0
    %150 = vmatpush1.xpose.msra.mxu0 %v147
    %151 = vmatprep.subr.mxu0 0.0
    %152 = vmatpush1.xpose.msra.mxu0 %v144
    %153 = vmatprep.subr.mxu0 0.0
    %154 = vmatpush1.xpose.msra.mxu0 %v141
    %155 = vmatprep.subr.mxu0 0.0
    %156 = vmatpush1.xpose.msra.mxu0 %v138
    %157 = vmatprep.subr.mxu0 0.0
    %158 = vmatpush1.xpose.msra.mxu0 %v135
    %159 = vmatprep.subr.mxu0 0.0
    %160 = vmatpush1.xpose.msra.mxu0 %v132
    %161 = vmatprep.subr.mxu0 0.0
    %162 = vmatpush1.xpose.msra.mxu0 %v129
    %163 = vmatprep.subr.mxu0 0.0
    %164 = vmatpush1.xpose.msra.mxu0 %v126
    %165 = vmatprep.subr.mxu0 0.0
    %166 = vmatpush1.xpose.msra.mxu0 %v123
    %167 = vmatprep.subr.mxu0 0.0
    %168 = vmatpush1.xpose.msra.mxu0 %v120
    %169 = vmatprep.subr.mxu0 0.0
    %170 = vmatpush1.xpose.msra.mxu0 %v117
    %171 = vmatprep.subr.mxu0 0.0
    %172 = vmatpush1.xpose.msra.mxu0 %v114
    %173 = vmatprep.subr.mxu0 0.0
    %174 = vmatpush1.xpose.msra.mxu0 %v111
    %175 = vmatprep.subr.mxu0 0.0
    %176 = vmatpush1.xpose.msra.mxu0 %v108
    %177 = vmatprep.subr.mxu0 0.0
    %178 = vmatpush1.xpose.msra.mxu0 %v105
    %179 = vmatprep.subr.mxu0 0.0
    %180 = vmatpush1.xpose.msra.mxu0 %v102
    %181 = vmatprep.subr.mxu0 0.0
    %182 = vmatpush2.xpose.msra.mxu0 0.0
    %183 = vmatprep.subr.mxu0 0.0
    %184 = vmatpush2.xpose.msra.mxu0 0.0
    %185 = vmatprep.subr.mxu0 0.0
    %186 = vmatpush2.xpose.msra.mxu0 0.0
    %187 = vmatprep.subr.mxu0 0.0
    %188 = vmatpush2.xpose.msra.mxu0 0.0
    %189 = vmatprep.subr.mxu0 0.0
    %190 = vmatpush2.xpose.msra.mxu0 0.0
    %191 = vmatprep.subr.mxu0 0.0
    %192 = vmatpush2.xpose.msra.mxu0 0.0
    %193 = vmatprep.subr.mxu0 0.0
    %194 = vmatpush2.xpose.msra.mxu0 0.0
    %195 = vmatprep.subr.mxu0 0.0
    %196 = vmatpush2.xpose.msra.mxu0 0.0
    %197 = vmatprep.subr.mxu0 0.0
    %198 = vmatpush2.xpose.msra.mxu0 0.0
    %199 = vmatprep.subr.mxu0 0.0
    %200 = vmatpush2.xpose.msra.mxu0 0.0
    %201 = vmatprep.subr.mxu0 0.0
    %202 = vmatpush2.xpose.msra.mxu0 0.0
    %203 = vmatprep.subr.mxu0 0.0
    %204 = vmatpush2.xpose.msra.mxu0 0.0
    %205 = vmatprep.subr.mxu0 0.0
    %206 = vmatpush2.xpose.msra.mxu0 0.0
    %207 = vmatprep.subr.mxu0 0.0
    %208 = vmatpush2.xpose.msra.mxu0 0.0
    %209 = vmatprep.subr.mxu0 0.0
    %210 = vmatpush2.xpose.msra.mxu0 0.0
    %211 = vmatprep.subr.mxu0 0.0
    %212 = vmatpush2.xpose.msra.mxu0 0.0
    %213 = vmatprep.mubr.f32.mxu0 0.0
    %214 = vmatmul.mubr.f32.gmra.mxu0 %v54
    %v215 = vpop.f32.mrf.mxu0
    %v216 = vadd.f32 0.0, %v215
    %v217 = vpop.f32.mrf.mxu0
    %218 = vmatprep.mubr.f32.mxu0 0.0
    %219 = vmatmul.mubr.f32.gmra.mxu0 %v57
    %v220 = vpop.f32.mrf.mxu0
    %v221 = vadd.f32 0.0, %v220
    %v222 = vpop.f32.mrf.mxu0
    %223 = vmatprep.mubr.f32.mxu0 0.0
    %224 = vmatmul.mubr.f32.gmra.mxu0 %v60
    %v225 = vpop.f32.mrf.mxu0
    %v226 = vadd.f32 0.0, %v225
    %v227 = vpop.f32.mrf.mxu0
    %228 = vmatprep.mubr.f32.mxu0 0.0
    %229 = vmatmul.mubr.f32.gmra.mxu0 %v63
    %v230 = vpop.f32.mrf.mxu0
    %v231 = vadd.f32 0.0, %v230
    %v232 = vpop.f32.mrf.mxu0
    %233 = vmatprep.mubr.f32.mxu0 0.0
    %234 = vmatmul.mubr.f32.gmra.mxu0 %v66
    %v235 = vpop.f32.mrf.mxu0
    %v236 = vadd.f32 0.0, %v235
    %v237 = vpop.f32.mrf.mxu0
    %238 = vmatprep.mubr.f32.mxu0 0.0
    %239 = vmatmul.mubr.f32.gmra.mxu0 %v69
    %v240 = vpop.f32.mrf.mxu0
    %v241 = vadd.f32 0.0, %v240
    %v242 = vpop.f32.mrf.mxu0
    %243 = vmatprep.mubr.f32.mxu0 0.0
    %244 = vmatmul.mubr.f32.gmra.mxu0 %v72
    %v245 = vpop.f32.mrf.mxu0
    %v246 = vadd.f32 0.0, %v245
    %v247 = vpop.f32.mrf.mxu0
    %248 = vmatprep.mubr.f32.mxu0 0.0
    %249 = vmatmul.mubr.f32.gmra.mxu0 %v75
    %v250 = vpop.f32.mrf.mxu0
    %v251 = vadd.f32 0.0, %v250
    %v252 = vpop.f32.mrf.mxu0
    %253 = vmatprep.mubr.f32.mxu0 0.0
    %254 = vmatmul.mubr.f32.gmra.mxu0 %v78
    %v255 = vpop.f32.mrf.mxu0
    %v256 = vadd.f32 0.0, %v255
    %v257 = vpop.f32.mrf.mxu0
    %258 = vmatprep.mubr.f32.mxu0 0.0
    %259 = vmatmul.mubr.f32.gmra.mxu0 %v81
    %v260 = vpop.f32.mrf.mxu0
    %v261 = vadd.f32 0.0, %v260
    %v262 = vpop.f32.mrf.mxu0
    %263 = vmatprep.mubr.f32.mxu0 0.0
    %264 = vmatmul.mubr.f32.gmra.mxu0 %v84
    %v265 = vpop.f32.mrf.mxu0
    %v266 = vadd.f32 0.0, %v265
    %v267 = vpop.f32.mrf.mxu0
    %268 = vmatprep.mubr.f32.mxu0 0.0
    %269 = vmatmul.mubr.f32.gmra.mxu0 %v87
    %v270 = vpop.f32.mrf.mxu0
    %v271 = vadd.f32 0.0, %v270
    %v272 = vpop.f32.mrf.mxu0
    %273 = vmatprep.mubr.f32.mxu0 0.0
    %274 = vmatmul.mubr.f32.gmra.mxu0 %v90
    %v275 = vpop.f32.mrf.mxu0
    %v276 = vadd.f32 0.0, %v275
    %v277 = vpop.f32.mrf.mxu0
    %278 = vmatprep.mubr.f32.mxu0 0.0
    %279 = vmatmul.mubr.f32.gmra.mxu0 %v93
    %v280 = vpop.f32.mrf.mxu0
    %v281 = vadd.f32 0.0, %v280
    %v282 = vpop.f32.mrf.mxu0
    %283 = vmatprep.mubr.f32.mxu0 0.0
    %284 = vmatmul.mubr.f32.gmra.mxu0 %v96
    %v285 = vpop.f32.mrf.mxu0
    %v286 = vadd.f32 0.0, %v285
    %v287 = vpop.f32.mrf.mxu0
    %288 = vmatprep.mubr.f32.mxu0 0.0
    %289 = vmatmul.mubr.f32.gmra.mxu0 %v99
    %v290 = vpop.f32.mrf.mxu0
    %v291 = vadd.f32 0.0, %v290
    %v292 = vpop.f32.mrf.mxu0
    %293 = vdwg.mxu0
    %s294 = scalar_lea.vmem %s1, %s18
    %v295 = vld [vmem:[%s294] sm:$0xff]
    %v296 = vld [vmem:[%s294 + $0x8] sm:$0xff]
    %v297 = vld [vmem:[%s294 + $0x10] sm:$0xff]
    %v298 = vld [vmem:[%s294 + $0x18] sm:$0xff]
    %v299 = vld [vmem:[%s294 + $0x20] sm:$0xff]
    %v300 = vld [vmem:[%s294 + $0x28] sm:$0xff]
    %v301 = vld [vmem:[%s294 + $0x30] sm:$0xff]
    %v302 = vld [vmem:[%s294 + $0x38] sm:$0xff]
    %v303 = vld [vmem:[%s294 + $0x40] sm:$0xff]
    %v304 = vld [vmem:[%s294 + $0x48] sm:$0xff]
    %v305 = vld [vmem:[%s294 + $0x50] sm:$0xff]
    %v306 = vld [vmem:[%s294 + $0x58] sm:$0xff]
    %v307 = vld [vmem:[%s294 + $0x60] sm:$0xff]
    %v308 = vld [vmem:[%s294 + $0x68] sm:$0xff]
    %v309 = vld [vmem:[%s294 + $0x70] sm:$0xff]
    %v310 = vld [vmem:[%s294 + $0x78] sm:$0xff]
    %v311 = vld [vmem:[%s2] sm:$0x1]
    %s312 = scalar_lea.vmem %s3, %s18
    %v313 = vld [vmem:[%s312] sm:$0xff]
    %v314 = vld [vmem:[%s312 + $0x8] sm:$0xff]
    %v315 = vld [vmem:[%s312 + $0x10] sm:$0xff]
    %v316 = vld [vmem:[%s312 + $0x18] sm:$0xff]
    %v317 = vld [vmem:[%s312 + $0x20] sm:$0xff]
    %v318 = vld [vmem:[%s312 + $0x28] sm:$0xff]
    %v319 = vld [vmem:[%s312 + $0x30] sm:$0xff]
    %v320 = vld [vmem:[%s312 + $0x38] sm:$0xff]
    %v321 = vld [vmem:[%s312 + $0x40] sm:$0xff]
    %v322 = vld [vmem:[%s312 + $0x48] sm:$0xff]
    %v323 = vld [vmem:[%s312 + $0x50] sm:$0xff]
    %v324 = vld [vmem:[%s312 + $0x58] sm:$0xff]
    %v325 = vld [vmem:[%s312 + $0x60] sm:$0xff]
    %v326 = vld [vmem:[%s312 + $0x68] sm:$0xff]
    %v327 = vld [vmem:[%s312 + $0x70] sm:$0xff]
    %v328 = vld [vmem:[%s312 + $0x78] sm:$0xff]
    %329 = vset.pattern.permute.xlu0 0
    %330 = vperm.xlu0 %329, %v295
    %v331 = vpop.permute.xlu0 %330
    %332 = vset.pattern.permute.xlu0 0
    %333 = vperm.xlu0 %332, %v296
    %v334 = vpop.permute.xlu0 %333
    %335 = vset.pattern.permute.xlu0 0
    %336 = vperm.xlu0 %335, %v297
    %v337 = vpop.permute.xlu0 %336
    %338 = vset.pattern.permute.xlu0 0
    %339 = vperm.xlu0 %338, %v298
    %v340 = vpop.permute.xlu0 %339
    %341 = vset.pattern.permute.xlu0 0
    %342 = vperm.xlu0 %341, %v299
    %v343 = vpop.permute.xlu0 %342
    %344 = vset.pattern.permute.xlu0 0
    %345 = vperm.xlu0 %344, %v300
    %v346 = vpop.permute.xlu0 %345
    %347 = vset.pattern.permute.xlu0 0
    %348 = vperm.xlu0 %347, %v301
    %v349 = vpop.permute.xlu0 %348
    %350 = vset.pattern.permute.xlu0 0
    %351 = vperm.xlu0 %350, %v302
    %v352 = vpop.permute.xlu0 %351
    %353 = vset.pattern.permute.xlu0 0
    %354 = vperm.xlu0 %353, %v303
    %v355 = vpop.permute.xlu0 %354
    %356 = vset.pattern.permute.xlu0 0
    %357 = vperm.xlu0 %356, %v304
    %v358 = vpop.permute.xlu0 %357
    %359 = vset.pattern.permute.xlu0 0
    %360 = vperm.xlu0 %359, %v305
    %v361 = vpop.permute.xlu0 %360
    %362 = vset.pattern.permute.xlu0 0
    %363 = vperm.xlu0 %362, %v306
    %v364 = vpop.permute.xlu0 %363
    %365 = vset.pattern.permute.xlu0 0
    %366 = vperm.xlu0 %365, %v307
    %v367 = vpop.permute.xlu0 %366
    %368 = vset.pattern.permute.xlu0 0
    %369 = vperm.xlu0 %368, %v308
    %v370 = vpop.permute.xlu0 %369
    %371 = vset.pattern.permute.xlu0 0
    %372 = vperm.xlu0 %371, %v309
    %v373 = vpop.permute.xlu0 %372
    %374 = vset.pattern.permute.xlu0 0
    %375 = vperm.xlu0 %374, %v310
    %v376 = vpop.permute.xlu0 %375
    %v377 = vlaneseq
    %v378 = vshrl.u32 %v377, 7
    %v379 = vsub.s32 0, %v378
    %v380 = vrot.slane %v311, %v379
    %vm381 = vcmp.eq.s32.totalorder %v331, %v380
    %vm382 = vcmp.eq.s32.totalorder %v334, %v380
    %vm383 = vcmp.eq.s32.totalorder %v337, %v380
    %vm384 = vcmp.eq.s32.totalorder %v340, %v380
    %vm385 = vcmp.eq.s32.totalorder %v343, %v380
    %vm386 = vcmp.eq.s32.totalorder %v346, %v380
    %vm387 = vcmp.eq.s32.totalorder %v349, %v380
    %vm388 = vcmp.eq.s32.totalorder %v352, %v380
    %vm389 = vcmp.eq.s32.totalorder %v355, %v380
    %vm390 = vcmp.eq.s32.totalorder %v358, %v380
    %vm391 = vcmp.eq.s32.totalorder %v361, %v380
    %vm392 = vcmp.eq.s32.totalorder %v364, %v380
    %vm393 = vcmp.eq.s32.totalorder %v367, %v380
    %vm394 = vcmp.eq.s32.totalorder %v370, %v380
    %vm395 = vcmp.eq.s32.totalorder %v373, %v380
    %vm396 = vcmp.eq.s32.totalorder %v376, %v380
    %v397 = vlaneseq
    %v398 = vand.u32 %v397, 127
    %v399 = vlaneseq
    %v400 = vshrl.u32 %v399, 7
    %v401 = vadd.s32 %v400, 8
    %v402 = vadd.s32 %v400, 16
    %v403 = vadd.s32 %v400, 24
    %v404 = vadd.s32 %v400, 32
    %v405 = vadd.s32 %v400, 40
    %v406 = vadd.s32 %v400, 48
    %v407 = vadd.s32 %v400, 56
    %v408 = vadd.s32 %v400, 64
    %v409 = vadd.s32 %v400, 72
    %v410 = vadd.s32 %v400, 80
    %v411 = vadd.s32 %v400, 88
    %v412 = vadd.s32 %v400, 96
    %v413 = vadd.s32 %v400, 104
    %v414 = vadd.s32 %v400, 112
    %v415 = vadd.s32 %v400, 120
    %v416 = vstv %s18
    %v417 = vadd.s32 %v400, %v416
    %v418 = vadd.s32 %v401, %v416
    %v419 = vadd.s32 %v402, %v416
    %v420 = vadd.s32 %v403, %v416
    %v421 = vadd.s32 %v404, %v416
    %v422 = vadd.s32 %v405, %v416
    %v423 = vadd.s32 %v406, %v416
    %v424 = vadd.s32 %v407, %v416
    %v425 = vadd.s32 %v408, %v416
    %v426 = vadd.s32 %v409, %v416
    %v427 = vadd.s32 %v410, %v416
    %v428 = vadd.s32 %v411, %v416
    %v429 = vadd.s32 %v412, %v416
    %v430 = vadd.s32 %v413, %v416
    %v431 = vadd.s32 %v414, %v416
    %v432 = vadd.s32 %v415, %v416
    %vm433 = vcmp.ne.s32.totalorder %v398, %v417
    %vm434 = vcmp.ne.s32.totalorder %v398, %v418
    %vm435 = vcmp.ne.s32.totalorder %v398, %v419
    %vm436 = vcmp.ne.s32.totalorder %v398, %v420
    %vm437 = vcmp.ne.s32.totalorder %v398, %v421
    %vm438 = vcmp.ne.s32.totalorder %v398, %v422
    %vm439 = vcmp.ne.s32.totalorder %v398, %v423
    %vm440 = vcmp.ne.s32.totalorder %v398, %v424
    %vm441 = vcmp.ne.s32.totalorder %v398, %v425
    %vm442 = vcmp.ne.s32.totalorder %v398, %v426
    %vm443 = vcmp.ne.s32.totalorder %v398, %v427
    %vm444 = vcmp.ne.s32.totalorder %v398, %v428
    %vm445 = vcmp.ne.s32.totalorder %v398, %v429
    %vm446 = vcmp.ne.s32.totalorder %v398, %v430
    %vm447 = vcmp.ne.s32.totalorder %v398, %v431
    %vm448 = vcmp.ne.s32.totalorder %v398, %v432
    %vm449 = vmand %vm381, %vm433
    %vm450 = vmand %vm382, %vm434
    %vm451 = vmand %vm383, %vm435
    %vm452 = vmand %vm384, %vm436
    %vm453 = vmand %vm385, %vm437
    %vm454 = vmand %vm386, %vm438
    %vm455 = vmand %vm387, %vm439
    %vm456 = vmand %vm388, %vm440
    %vm457 = vmand %vm389, %vm441
    %vm458 = vmand %vm390, %vm442
    %vm459 = vmand %vm391, %vm443
    %vm460 = vmand %vm392, %vm444
    %vm461 = vmand %vm393, %vm445
    %vm462 = vmand %vm394, %vm446
    %vm463 = vmand %vm395, %vm447
    %vm464 = vmand %vm396, %vm448
    %vm465 = vcmp.lt.f32.partialorder %v216, 0.99999
    %vm466 = vcmp.lt.f32.partialorder %v221, 0.99999
    %vm467 = vcmp.lt.f32.partialorder %v226, 0.99999
    %vm468 = vcmp.lt.f32.partialorder %v231, 0.99999
    %vm469 = vcmp.lt.f32.partialorder %v236, 0.99999
    %vm470 = vcmp.lt.f32.partialorder %v241, 0.99999
    %vm471 = vcmp.lt.f32.partialorder %v246, 0.99999
    %vm472 = vcmp.lt.f32.partialorder %v251, 0.99999
    %vm473 = vcmp.lt.f32.partialorder %v256, 0.99999
    %vm474 = vcmp.lt.f32.partialorder %v261, 0.99999
    %vm475 = vcmp.lt.f32.partialorder %v266, 0.99999
    %vm476 = vcmp.lt.f32.partialorder %v271, 0.99999
    %vm477 = vcmp.lt.f32.partialorder %v276, 0.99999
    %vm478 = vcmp.lt.f32.partialorder %v281, 0.99999
    %vm479 = vcmp.lt.f32.partialorder %v286, 0.99999
    %vm480 = vcmp.lt.f32.partialorder %v291, 0.99999
    %vm481 = vmand %vm449, %vm465
    %vm482 = vmand %vm450, %vm466
    %vm483 = vmand %vm451, %vm467
    %vm484 = vmand %vm452, %vm468
    %vm485 = vmand %vm453, %vm469
    %vm486 = vmand %vm454, %vm470
    %vm487 = vmand %vm455, %vm471
    %vm488 = vmand %vm456, %vm472
    %vm489 = vmand %vm457, %vm473
    %vm490 = vmand %vm458, %vm474
    %vm491 = vmand %vm459, %vm475
    %vm492 = vmand %vm460, %vm476
    %vm493 = vmand %vm461, %vm477
    %vm494 = vmand %vm462, %vm478
    %vm495 = vmand %vm463, %vm479
    %vm496 = vmand %vm464, %vm480
    %vm497 = vmxor %vm381, 1
    %vm498 = vmxor %vm382, 1
    %vm499 = vmxor %vm383, 1
    %vm500 = vmxor %vm384, 1
    %vm501 = vmxor %vm385, 1
    %vm502 = vmxor %vm386, 1
    %vm503 = vmxor %vm387, 1
    %vm504 = vmxor %vm388, 1
    %vm505 = vmxor %vm389, 1
    %vm506 = vmxor %vm390, 1
    %vm507 = vmxor %vm391, 1
    %vm508 = vmxor %vm392, 1
    %vm509 = vmxor %vm393, 1
    %vm510 = vmxor %vm394, 1
    %vm511 = vmxor %vm395, 1
    %vm512 = vmxor %vm396, 1
    %vm513 = vcmp.lt.s32.totalorder %v398, 8
    %vm514 = vmand %vm497, %vm513
    %vm515 = vmand %vm498, %vm513
    %vm516 = vmand %vm499, %vm513
    %vm517 = vmand %vm500, %vm513
    %vm518 = vmand %vm501, %vm513
    %vm519 = vmand %vm502, %vm513
    %vm520 = vmand %vm503, %vm513
    %vm521 = vmand %vm504, %vm513
    %vm522 = vmand %vm505, %vm513
    %vm523 = vmand %vm506, %vm513
    %vm524 = vmand %vm507, %vm513
    %vm525 = vmand %vm508, %vm513
    %vm526 = vmand %vm509, %vm513
    %vm527 = vmand %vm510, %vm513
    %vm528 = vmand %vm511, %vm513
    %vm529 = vmand %vm512, %vm513
    %v530 = vsel %vm481, %v216, 1e+30
    %v531 = vsel %vm482, %v221, 1e+30
    %v532 = vsel %vm483, %v226, 1e+30
    %v533 = vsel %vm484, %v231, 1e+30
    %v534 = vsel %vm485, %v236, 1e+30
    %v535 = vsel %vm486, %v241, 1e+30
    %v536 = vsel %vm487, %v246, 1e+30
    %v537 = vsel %vm488, %v251, 1e+30
    %v538 = vsel %vm489, %v256, 1e+30
    %v539 = vsel %vm490, %v261, 1e+30
    %v540 = vsel %vm491, %v266, 1e+30
    %v541 = vsel %vm492, %v271, 1e+30
    %v542 = vsel %vm493, %v276, 1e+30
    %v543 = vsel %vm494, %v281, 1e+30
    %v544 = vsel %vm495, %v286, 1e+30
    %v545 = vsel %vm496, %v291, 1e+30
    %546 = vmin.xlane.f32.xlu0 %v530
    %v547 = vpop.xlane.xlu0 %546
    %548 = vmin.xlane.f32.xlu0 %v531
    %v549 = vpop.xlane.xlu0 %548
    %550 = vmin.xlane.f32.xlu0 %v532
    %v551 = vpop.xlane.xlu0 %550
    %552 = vmin.xlane.f32.xlu0 %v533
    %v553 = vpop.xlane.xlu0 %552
    %554 = vmin.xlane.f32.xlu0 %v534
    %v555 = vpop.xlane.xlu0 %554
    %556 = vmin.xlane.f32.xlu0 %v535
    %v557 = vpop.xlane.xlu0 %556
    %558 = vmin.xlane.f32.xlu0 %v536
    %v559 = vpop.xlane.xlu0 %558
    %560 = vmin.xlane.f32.xlu0 %v537
    %v561 = vpop.xlane.xlu0 %560
    %562 = vmin.xlane.f32.xlu0 %v538
    %v563 = vpop.xlane.xlu0 %562
    %564 = vmin.xlane.f32.xlu0 %v539
    %v565 = vpop.xlane.xlu0 %564
    %566 = vmin.xlane.f32.xlu0 %v540
    %v567 = vpop.xlane.xlu0 %566
    %568 = vmin.xlane.f32.xlu0 %v541
    %v569 = vpop.xlane.xlu0 %568
    %570 = vmin.xlane.f32.xlu0 %v542
    %v571 = vpop.xlane.xlu0 %570
    %572 = vmin.xlane.f32.xlu0 %v543
    %v573 = vpop.xlane.xlu0 %572
    %574 = vmin.xlane.f32.xlu0 %v544
    %v575 = vpop.xlane.xlu0 %574
    %576 = vmin.xlane.f32.xlu0 %v545
    %v577 = vpop.xlane.xlu0 %576
    %v578 = vsel %vm514, %v216, -1e+30
    %v579 = vsel %vm515, %v221, -1e+30
    %v580 = vsel %vm516, %v226, -1e+30
    %v581 = vsel %vm517, %v231, -1e+30
    %v582 = vsel %vm518, %v236, -1e+30
    %v583 = vsel %vm519, %v241, -1e+30
    %v584 = vsel %vm520, %v246, -1e+30
    %v585 = vsel %vm521, %v251, -1e+30
    %v586 = vsel %vm522, %v256, -1e+30
    %v587 = vsel %vm523, %v261, -1e+30
    %v588 = vsel %vm524, %v266, -1e+30
    %v589 = vsel %vm525, %v271, -1e+30
    %v590 = vsel %vm526, %v276, -1e+30
    %v591 = vsel %vm527, %v281, -1e+30
    %v592 = vsel %vm528, %v286, -1e+30
    %v593 = vsel %vm529, %v291, -1e+30
    %594 = vmax.xlane.f32.xlu0 %v578
    %v595 = vpop.xlane.xlu0 %594
    %596 = vmax.xlane.f32.xlu0 %v579
    %v597 = vpop.xlane.xlu0 %596
    %598 = vmax.xlane.f32.xlu0 %v580
    %v599 = vpop.xlane.xlu0 %598
    %600 = vmax.xlane.f32.xlu0 %v581
    %v601 = vpop.xlane.xlu0 %600
    %602 = vmax.xlane.f32.xlu0 %v582
    %v603 = vpop.xlane.xlu0 %602
    %604 = vmax.xlane.f32.xlu0 %v583
    %v605 = vpop.xlane.xlu0 %604
    %606 = vmax.xlane.f32.xlu0 %v584
    %v607 = vpop.xlane.xlu0 %606
    %608 = vmax.xlane.f32.xlu0 %v585
    %v609 = vpop.xlane.xlu0 %608
    %610 = vmax.xlane.f32.xlu0 %v586
    %v611 = vpop.xlane.xlu0 %610
    %612 = vmax.xlane.f32.xlu0 %v587
    %v613 = vpop.xlane.xlu0 %612
    %614 = vmax.xlane.f32.xlu0 %v588
    %v615 = vpop.xlane.xlu0 %614
    %616 = vmax.xlane.f32.xlu0 %v589
    %v617 = vpop.xlane.xlu0 %616
    %618 = vmax.xlane.f32.xlu0 %v590
    %v619 = vpop.xlane.xlu0 %618
    %620 = vmax.xlane.f32.xlu0 %v591
    %v621 = vpop.xlane.xlu0 %620
    %622 = vmax.xlane.f32.xlu0 %v592
    %v623 = vpop.xlane.xlu0 %622
    %624 = vmax.xlane.f32.xlu0 %v593
    %v625 = vpop.xlane.xlu0 %624
    %v626 = vadd.f32 %v216, 0.1
    %v627 = vadd.f32 %v221, 0.1
    %v628 = vadd.f32 %v226, 0.1
    %v629 = vadd.f32 %v231, 0.1
    %v630 = vadd.f32 %v236, 0.1
    %v631 = vadd.f32 %v241, 0.1
    %v632 = vadd.f32 %v246, 0.1
    %v633 = vadd.f32 %v251, 0.1
    %v634 = vadd.f32 %v256, 0.1
    %v635 = vadd.f32 %v261, 0.1
    %v636 = vadd.f32 %v266, 0.1
    %v637 = vadd.f32 %v271, 0.1
    %v638 = vadd.f32 %v276, 0.1
    %v639 = vadd.f32 %v281, 0.1
    %v640 = vadd.f32 %v286, 0.1
    %v641 = vadd.f32 %v291, 0.1
    %vm642 = vcmp.gt.f32.partialorder %v626, %v547
    %vm643 = vcmp.gt.f32.partialorder %v627, %v549
    %vm644 = vcmp.gt.f32.partialorder %v628, %v551
    %vm645 = vcmp.gt.f32.partialorder %v629, %v553
    %vm646 = vcmp.gt.f32.partialorder %v630, %v555
    %vm647 = vcmp.gt.f32.partialorder %v631, %v557
    %vm648 = vcmp.gt.f32.partialorder %v632, %v559
    %vm649 = vcmp.gt.f32.partialorder %v633, %v561
    %vm650 = vcmp.gt.f32.partialorder %v634, %v563
    %vm651 = vcmp.gt.f32.partialorder %v635, %v565
    %vm652 = vcmp.gt.f32.partialorder %v636, %v567
    %vm653 = vcmp.gt.f32.partialorder %v637, %v569
    %vm654 = vcmp.gt.f32.partialorder %v638, %v571
    %vm655 = vcmp.gt.f32.partialorder %v639, %v573
    %vm656 = vcmp.gt.f32.partialorder %v640, %v575
    %vm657 = vcmp.gt.f32.partialorder %v641, %v577
    %vm658 = vmand %vm514, %vm642
    %vm659 = vmand %vm515, %vm643
    %vm660 = vmand %vm516, %vm644
    %vm661 = vmand %vm517, %vm645
    %vm662 = vmand %vm518, %vm646
    %vm663 = vmand %vm519, %vm647
    %vm664 = vmand %vm520, %vm648
    %vm665 = vmand %vm521, %vm649
    %vm666 = vmand %vm522, %vm650
    %vm667 = vmand %vm523, %vm651
    %vm668 = vmand %vm524, %vm652
    %vm669 = vmand %vm525, %vm653
    %vm670 = vmand %vm526, %vm654
    %vm671 = vmand %vm527, %vm655
    %vm672 = vmand %vm528, %vm656
    %vm673 = vmand %vm529, %vm657
    %v674 = vsub.f32 %v216, 0.1
    %v675 = vsub.f32 %v221, 0.1
    %v676 = vsub.f32 %v226, 0.1
    %v677 = vsub.f32 %v231, 0.1
    %v678 = vsub.f32 %v236, 0.1
    %v679 = vsub.f32 %v241, 0.1
    %v680 = vsub.f32 %v246, 0.1
    %v681 = vsub.f32 %v251, 0.1
    %v682 = vsub.f32 %v256, 0.1
    %v683 = vsub.f32 %v261, 0.1
    %v684 = vsub.f32 %v266, 0.1
    %v685 = vsub.f32 %v271, 0.1
    %v686 = vsub.f32 %v276, 0.1
    %v687 = vsub.f32 %v281, 0.1
    %v688 = vsub.f32 %v286, 0.1
    %v689 = vsub.f32 %v291, 0.1
    %vm690 = vcmp.lt.f32.partialorder %v674, %v595
    %vm691 = vcmp.lt.f32.partialorder %v675, %v597
    %vm692 = vcmp.lt.f32.partialorder %v676, %v599
    %vm693 = vcmp.lt.f32.partialorder %v677, %v601
    %vm694 = vcmp.lt.f32.partialorder %v678, %v603
    %vm695 = vcmp.lt.f32.partialorder %v679, %v605
    %vm696 = vcmp.lt.f32.partialorder %v680, %v607
    %vm697 = vcmp.lt.f32.partialorder %v681, %v609
    %vm698 = vcmp.lt.f32.partialorder %v682, %v611
    %vm699 = vcmp.lt.f32.partialorder %v683, %v613
    %vm700 = vcmp.lt.f32.partialorder %v684, %v615
    %vm701 = vcmp.lt.f32.partialorder %v685, %v617
    %vm702 = vcmp.lt.f32.partialorder %v686, %v619
    %vm703 = vcmp.lt.f32.partialorder %v687, %v621
    %vm704 = vcmp.lt.f32.partialorder %v688, %v623
    %vm705 = vcmp.lt.f32.partialorder %v689, %v625
    %vm706 = vmand %vm481, %vm690
    %vm707 = vmand %vm482, %vm691
    %vm708 = vmand %vm483, %vm692
    %vm709 = vmand %vm484, %vm693
    %vm710 = vmand %vm485, %vm694
    %vm711 = vmand %vm486, %vm695
    %vm712 = vmand %vm487, %vm696
    %vm713 = vmand %vm488, %vm697
    %vm714 = vmand %vm489, %vm698
    %vm715 = vmand %vm490, %vm699
    %vm716 = vmand %vm491, %vm700
    %vm717 = vmand %vm492, %vm701
    %vm718 = vmand %vm493, %vm702
    %vm719 = vmand %vm494, %vm703
    %vm720 = vmand %vm495, %vm704
    %vm721 = vmand %vm496, %vm705
    %v722 = vsel %vm706, -2.0, 40.0
    %v723 = vsel %vm707, -2.0, 40.0
    %v724 = vsel %vm708, -2.0, 40.0
    %v725 = vsel %vm709, -2.0, 40.0
    %v726 = vsel %vm710, -2.0, 40.0
    %v727 = vsel %vm711, -2.0, 40.0
    %v728 = vsel %vm712, -2.0, 40.0
    %v729 = vsel %vm713, -2.0, 40.0
    %v730 = vsel %vm714, -2.0, 40.0
    %v731 = vsel %vm715, -2.0, 40.0
    %v732 = vsel %vm716, -2.0, 40.0
    %v733 = vsel %vm717, -2.0, 40.0
    %v734 = vsel %vm718, -2.0, 40.0
    %v735 = vsel %vm719, -2.0, 40.0
    %v736 = vsel %vm720, -2.0, 40.0
    %v737 = vsel %vm721, -2.0, 40.0
    %739 = vset.pattern.permute.xlu0 0
    %740 = vperm.xlu0 %739, %v313
    %v741 = vpop.permute.xlu0 %740
    %744 = vset.pattern.permute.xlu0 0
    %745 = vperm.xlu0 %744, %v314
    %v746 = vpop.permute.xlu0 %745
    %749 = vset.pattern.permute.xlu0 0
    %750 = vperm.xlu0 %749, %v315
    %v751 = vpop.permute.xlu0 %750
    %754 = vset.pattern.permute.xlu0 0
    %755 = vperm.xlu0 %754, %v316
    %v756 = vpop.permute.xlu0 %755
    %759 = vset.pattern.permute.xlu0 0
    %760 = vperm.xlu0 %759, %v317
    %v761 = vpop.permute.xlu0 %760
    %764 = vset.pattern.permute.xlu0 0
    %765 = vperm.xlu0 %764, %v318
    %v766 = vpop.permute.xlu0 %765
    %769 = vset.pattern.permute.xlu0 0
    %770 = vperm.xlu0 %769, %v319
    %v771 = vpop.permute.xlu0 %770
    %774 = vset.pattern.permute.xlu0 0
    %775 = vperm.xlu0 %774, %v320
    %v776 = vpop.permute.xlu0 %775
    %779 = vset.pattern.permute.xlu0 0
    %780 = vperm.xlu0 %779, %v321
    %v781 = vpop.permute.xlu0 %780
    %784 = vset.pattern.permute.xlu0 0
    %785 = vperm.xlu0 %784, %v322
    %v786 = vpop.permute.xlu0 %785
    %789 = vset.pattern.permute.xlu0 0
    %790 = vperm.xlu0 %789, %v323
    %v791 = vpop.permute.xlu0 %790
    %794 = vset.pattern.permute.xlu0 0
    %795 = vperm.xlu0 %794, %v324
    %v796 = vpop.permute.xlu0 %795
    %799 = vset.pattern.permute.xlu0 0
    %800 = vperm.xlu0 %799, %v325
    %v801 = vpop.permute.xlu0 %800
    %804 = vset.pattern.permute.xlu0 0
    %805 = vperm.xlu0 %804, %v326
    %v806 = vpop.permute.xlu0 %805
    %809 = vset.pattern.permute.xlu0 0
    %810 = vperm.xlu0 %809, %v327
    %v811 = vpop.permute.xlu0 %810
    %814 = vset.pattern.permute.xlu0 0
    %815 = vperm.xlu0 %814, %v328
    %v816 = vpop.permute.xlu0 %815
    %v818 = vsub.f32 %v216, %v741
    %v819 = vsub.f32 %v221, %v746
    %v820 = vsub.f32 %v226, %v751
    %v821 = vsub.f32 %v231, %v756
    %v822 = vsub.f32 %v236, %v761
    %v823 = vsub.f32 %v241, %v766
    %v824 = vsub.f32 %v246, %v771
    %v825 = vsub.f32 %v251, %v776
    %v826 = vsub.f32 %v256, %v781
    %v827 = vsub.f32 %v261, %v786
    %v828 = vsub.f32 %v266, %v791
    %v829 = vsub.f32 %v271, %v796
    %v830 = vsub.f32 %v276, %v801
    %v831 = vsub.f32 %v281, %v806
    %v832 = vsub.f32 %v286, %v811
    %v833 = vsub.f32 %v291, %v816
    %v834 = vmul.f32 %v722, %v818
    %v835 = vmul.f32 %v723, %v819
    %v836 = vmul.f32 %v724, %v820
    %v837 = vmul.f32 %v725, %v821
    %v838 = vmul.f32 %v726, %v822
    %v839 = vmul.f32 %v727, %v823
    %v840 = vmul.f32 %v728, %v824
    %v841 = vmul.f32 %v729, %v825
    %v842 = vmul.f32 %v730, %v826
    %v843 = vmul.f32 %v731, %v827
    %v844 = vmul.f32 %v732, %v828
    %v845 = vmul.f32 %v733, %v829
    %v846 = vmul.f32 %v734, %v830
    %v847 = vmul.f32 %v735, %v831
    %v848 = vmul.f32 %v736, %v832
    %v849 = vmul.f32 %v737, %v833
    %v850 = vmul.f32 %v834, 1.442695
    %v851 = vpow.pop %v850
    %v852 = vmul.f32 %v835, 1.442695
    %v853 = vpow.pop %v852
    %v854 = vmul.f32 %v836, 1.442695
    %v855 = vpow.pop %v854
    %v856 = vmul.f32 %v837, 1.442695
    %v857 = vpow.pop %v856
    %v858 = vmul.f32 %v838, 1.442695
    %v859 = vpow.pop %v858
    %v860 = vmul.f32 %v839, 1.442695
    %v861 = vpow.pop %v860
    %v862 = vmul.f32 %v840, 1.442695
    %v863 = vpow.pop %v862
    %v864 = vmul.f32 %v841, 1.442695
    %v865 = vpow.pop %v864
    %v866 = vmul.f32 %v842, 1.442695
    %v867 = vpow.pop %v866
    %v868 = vmul.f32 %v843, 1.442695
    %v869 = vpow.pop %v868
    %v870 = vmul.f32 %v844, 1.442695
    %v871 = vpow.pop %v870
    %v872 = vmul.f32 %v845, 1.442695
    %v873 = vpow.pop %v872
    %v874 = vmul.f32 %v846, 1.442695
    %v875 = vpow.pop %v874
    %v876 = vmul.f32 %v847, 1.442695
    %v877 = vpow.pop %v876
    %v878 = vmul.f32 %v848, 1.442695
    %v879 = vpow.pop %v878
    %v880 = vmul.f32 %v849, 1.442695
    %v881 = vpow.pop %v880
    %v882 = vsel %vm706, %v851, 0.0
    %v883 = vsel %vm707, %v853, 0.0
    %v884 = vsel %vm708, %v855, 0.0
    %v885 = vsel %vm709, %v857, 0.0
    %v886 = vsel %vm710, %v859, 0.0
    %v887 = vsel %vm711, %v861, 0.0
    %v888 = vsel %vm712, %v863, 0.0
    %v889 = vsel %vm713, %v865, 0.0
    %v890 = vsel %vm714, %v867, 0.0
    %v891 = vsel %vm715, %v869, 0.0
    %v892 = vsel %vm716, %v871, 0.0
    %v893 = vsel %vm717, %v873, 0.0
    %v894 = vsel %vm718, %v875, 0.0
    %v895 = vsel %vm719, %v877, 0.0
    %v896 = vsel %vm720, %v879, 0.0
    %v897 = vsel %vm721, %v881, 0.0
    %898 = vadd.xlane.f32.xlu0 %v882
    %v899 = vpop.xlane.xlu0 %898
    %900 = vadd.xlane.f32.xlu0 %v883
    %v901 = vpop.xlane.xlu0 %900
    %902 = vadd.xlane.f32.xlu0 %v884
    %v903 = vpop.xlane.xlu0 %902
    %904 = vadd.xlane.f32.xlu0 %v885
    %v905 = vpop.xlane.xlu0 %904
    %906 = vadd.xlane.f32.xlu0 %v886
    %v907 = vpop.xlane.xlu0 %906
    %908 = vadd.xlane.f32.xlu0 %v887
    %v909 = vpop.xlane.xlu0 %908
    %910 = vadd.xlane.f32.xlu0 %v888
    %v911 = vpop.xlane.xlu0 %910
    %912 = vadd.xlane.f32.xlu0 %v889
    %v913 = vpop.xlane.xlu0 %912
    %914 = vadd.xlane.f32.xlu0 %v890
    %v915 = vpop.xlane.xlu0 %914
    %916 = vadd.xlane.f32.xlu0 %v891
    %v917 = vpop.xlane.xlu0 %916
    %918 = vadd.xlane.f32.xlu0 %v892
    %v919 = vpop.xlane.xlu0 %918
    %920 = vadd.xlane.f32.xlu0 %v893
    %v921 = vpop.xlane.xlu0 %920
    %922 = vadd.xlane.f32.xlu0 %v894
    %v923 = vpop.xlane.xlu0 %922
    %924 = vadd.xlane.f32.xlu0 %v895
    %v925 = vpop.xlane.xlu0 %924
    %926 = vadd.xlane.f32.xlu0 %v896
    %v927 = vpop.xlane.xlu0 %926
    %928 = vadd.xlane.f32.xlu0 %v897
    %v929 = vpop.xlane.xlu0 %928
    %v930 = vsel %vm658, %v851, 0.0
    %v931 = vsel %vm659, %v853, 0.0
    %v932 = vsel %vm660, %v855, 0.0
    %v933 = vsel %vm661, %v857, 0.0
    %v934 = vsel %vm662, %v859, 0.0
    %v935 = vsel %vm663, %v861, 0.0
    %v936 = vsel %vm664, %v863, 0.0
    %v937 = vsel %vm665, %v865, 0.0
    %v938 = vsel %vm666, %v867, 0.0
    %v939 = vsel %vm667, %v869, 0.0
    %v940 = vsel %vm668, %v871, 0.0
    %v941 = vsel %vm669, %v873, 0.0
    %v942 = vsel %vm670, %v875, 0.0
    %v943 = vsel %vm671, %v877, 0.0
    %v944 = vsel %vm672, %v879, 0.0
    %v945 = vsel %vm673, %v881, 0.0
    %946 = vadd.xlane.f32.xlu0 %v930
    %v947 = vpop.xlane.xlu0 %946
    %948 = vadd.xlane.f32.xlu0 %v931
    %v949 = vpop.xlane.xlu0 %948
    %950 = vadd.xlane.f32.xlu0 %v932
    %v951 = vpop.xlane.xlu0 %950
    %952 = vadd.xlane.f32.xlu0 %v933
    %v953 = vpop.xlane.xlu0 %952
    %954 = vadd.xlane.f32.xlu0 %v934
    %v955 = vpop.xlane.xlu0 %954
    %956 = vadd.xlane.f32.xlu0 %v935
    %v957 = vpop.xlane.xlu0 %956
    %958 = vadd.xlane.f32.xlu0 %v936
    %v959 = vpop.xlane.xlu0 %958
    %960 = vadd.xlane.f32.xlu0 %v937
    %v961 = vpop.xlane.xlu0 %960
    %962 = vadd.xlane.f32.xlu0 %v938
    %v963 = vpop.xlane.xlu0 %962
    %964 = vadd.xlane.f32.xlu0 %v939
    %v965 = vpop.xlane.xlu0 %964
    %966 = vadd.xlane.f32.xlu0 %v940
    %v967 = vpop.xlane.xlu0 %966
    %968 = vadd.xlane.f32.xlu0 %v941
    %v969 = vpop.xlane.xlu0 %968
    %970 = vadd.xlane.f32.xlu0 %v942
    %v971 = vpop.xlane.xlu0 %970
    %972 = vadd.xlane.f32.xlu0 %v943
    %v973 = vpop.xlane.xlu0 %972
    %974 = vadd.xlane.f32.xlu0 %v944
    %v975 = vpop.xlane.xlu0 %974
    %976 = vadd.xlane.f32.xlu0 %v945
    %v977 = vpop.xlane.xlu0 %976
    %vm978 = vcmp.lt.s32.totalorder %v417, 8
    %vm979 = vcmp.lt.s32.totalorder %v418, 8
    %vm980 = vcmp.lt.s32.totalorder %v419, 8
    %vm981 = vcmp.lt.s32.totalorder %v420, 8
    %vm982 = vcmp.lt.s32.totalorder %v421, 8
    %vm983 = vcmp.lt.s32.totalorder %v422, 8
    %vm984 = vcmp.lt.s32.totalorder %v423, 8
    %vm985 = vcmp.lt.s32.totalorder %v424, 8
    %vm986 = vcmp.lt.s32.totalorder %v425, 8
    %vm987 = vcmp.lt.s32.totalorder %v426, 8
    %vm988 = vcmp.lt.s32.totalorder %v427, 8
    %vm989 = vcmp.lt.s32.totalorder %v428, 8
    %vm990 = vcmp.lt.s32.totalorder %v429, 8
    %vm991 = vcmp.lt.s32.totalorder %v430, 8
    %vm992 = vcmp.lt.s32.totalorder %v431, 8
    %vm993 = vcmp.lt.s32.totalorder %v432, 8
    %vm994 = vcmp.gt.f32.partialorder %v899, 0.0
    %vm995 = vcmp.gt.f32.partialorder %v901, 0.0
    %vm996 = vcmp.gt.f32.partialorder %v903, 0.0
    %vm997 = vcmp.gt.f32.partialorder %v905, 0.0
    %vm998 = vcmp.gt.f32.partialorder %v907, 0.0
    %vm999 = vcmp.gt.f32.partialorder %v909, 0.0
    %vm1000 = vcmp.gt.f32.partialorder %v911, 0.0
    %vm1001 = vcmp.gt.f32.partialorder %v913, 0.0
    %vm1002 = vcmp.gt.f32.partialorder %v915, 0.0
    %vm1003 = vcmp.gt.f32.partialorder %v917, 0.0
    %vm1004 = vcmp.gt.f32.partialorder %v919, 0.0
    %vm1005 = vcmp.gt.f32.partialorder %v921, 0.0
    %vm1006 = vcmp.gt.f32.partialorder %v923, 0.0
    %vm1007 = vcmp.gt.f32.partialorder %v925, 0.0
    %vm1008 = vcmp.gt.f32.partialorder %v927, 0.0
    %vm1009 = vcmp.gt.f32.partialorder %v929, 0.0
    %vm1010 = vcmp.gt.f32.partialorder %v947, 0.0
    %vm1011 = vcmp.gt.f32.partialorder %v949, 0.0
    %vm1012 = vcmp.gt.f32.partialorder %v951, 0.0
    %vm1013 = vcmp.gt.f32.partialorder %v953, 0.0
    %vm1014 = vcmp.gt.f32.partialorder %v955, 0.0
    %vm1015 = vcmp.gt.f32.partialorder %v957, 0.0
    %vm1016 = vcmp.gt.f32.partialorder %v959, 0.0
    %vm1017 = vcmp.gt.f32.partialorder %v961, 0.0
    %vm1018 = vcmp.gt.f32.partialorder %v963, 0.0
    %vm1019 = vcmp.gt.f32.partialorder %v965, 0.0
    %vm1020 = vcmp.gt.f32.partialorder %v967, 0.0
    %vm1021 = vcmp.gt.f32.partialorder %v969, 0.0
    %vm1022 = vcmp.gt.f32.partialorder %v971, 0.0
    %vm1023 = vcmp.gt.f32.partialorder %v973, 0.0
    %vm1024 = vcmp.gt.f32.partialorder %v975, 0.0
    %vm1025 = vcmp.gt.f32.partialorder %v977, 0.0
    %vm1026 = vmand %vm994, %vm1010
    %vm1027 = vmand %vm995, %vm1011
    %vm1028 = vmand %vm996, %vm1012
    %vm1029 = vmand %vm997, %vm1013
    %vm1030 = vmand %vm998, %vm1014
    %vm1031 = vmand %vm999, %vm1015
    %vm1032 = vmand %vm1000, %vm1016
    %vm1033 = vmand %vm1001, %vm1017
    %vm1034 = vmand %vm1002, %vm1018
    %vm1035 = vmand %vm1003, %vm1019
    %vm1036 = vmand %vm1004, %vm1020
    %vm1037 = vmand %vm1005, %vm1021
    %vm1038 = vmand %vm1006, %vm1022
    %vm1039 = vmand %vm1007, %vm1023
    %vm1040 = vmand %vm1008, %vm1024
    %vm1041 = vmand %vm1009, %vm1025
    %vm1042 = vmand %vm1026, %vm978
    %vm1043 = vmand %vm1027, %vm979
    %vm1044 = vmand %vm1028, %vm980
    %vm1045 = vmand %vm1029, %vm981
    %vm1046 = vmand %vm1030, %vm982
    %vm1047 = vmand %vm1031, %vm983
    %vm1048 = vmand %vm1032, %vm984
    %vm1049 = vmand %vm1033, %vm985
    %vm1050 = vmand %vm1034, %vm986
    %vm1051 = vmand %vm1035, %vm987
    %vm1052 = vmand %vm1036, %vm988
    %vm1053 = vmand %vm1037, %vm989
    %vm1054 = vmand %vm1038, %vm990
    %vm1055 = vmand %vm1039, %vm991
    %vm1056 = vmand %vm1040, %vm992
    %vm1057 = vmand %vm1041, %vm993
    %v1058 = vadd.f32 %v899, 1.0
    %v1059 = vadd.f32 %v901, 1.0
    %v1060 = vadd.f32 %v903, 1.0
    %v1061 = vadd.f32 %v905, 1.0
    %v1062 = vadd.f32 %v907, 1.0
    %v1063 = vadd.f32 %v909, 1.0
    %v1064 = vadd.f32 %v911, 1.0
    %v1065 = vadd.f32 %v913, 1.0
    %v1066 = vadd.f32 %v915, 1.0
    %v1067 = vadd.f32 %v917, 1.0
    %v1068 = vadd.f32 %v919, 1.0
    %v1069 = vadd.f32 %v921, 1.0
    %v1070 = vadd.f32 %v923, 1.0
    %v1071 = vadd.f32 %v925, 1.0
    %v1072 = vadd.f32 %v927, 1.0
    %v1073 = vadd.f32 %v929, 1.0
    %v1074 = vlog2.pop %v1058
    %v1075 = vmul.f32 %v1074, 0.6931472
    %v1076 = vlog2.pop %v1059
    %v1077 = vmul.f32 %v1076, 0.6931472
    %v1078 = vlog2.pop %v1060
    %v1079 = vmul.f32 %v1078, 0.6931472
    %v1080 = vlog2.pop %v1061
    %v1081 = vmul.f32 %v1080, 0.6931472
    %v1082 = vlog2.pop %v1062
    %v1083 = vmul.f32 %v1082, 0.6931472
    %v1084 = vlog2.pop %v1063
    %v1085 = vmul.f32 %v1084, 0.6931472
    %v1086 = vlog2.pop %v1064
    %v1087 = vmul.f32 %v1086, 0.6931472
    %v1088 = vlog2.pop %v1065
    %v1089 = vmul.f32 %v1088, 0.6931472
    %v1090 = vlog2.pop %v1066
    %v1091 = vmul.f32 %v1090, 0.6931472
    %v1092 = vlog2.pop %v1067
    %v1093 = vmul.f32 %v1092, 0.6931472
    %v1094 = vlog2.pop %v1068
    %v1095 = vmul.f32 %v1094, 0.6931472
    %v1096 = vlog2.pop %v1069
    %v1097 = vmul.f32 %v1096, 0.6931472
    %v1098 = vlog2.pop %v1070
    %v1099 = vmul.f32 %v1098, 0.6931472
    %v1100 = vlog2.pop %v1071
    %v1101 = vmul.f32 %v1100, 0.6931472
    %v1102 = vlog2.pop %v1072
    %v1103 = vmul.f32 %v1102, 0.6931472
    %v1104 = vlog2.pop %v1073
    %v1105 = vmul.f32 %v1104, 0.6931472
    %v1106 = vmul.f32 %v1075, 0.5
    %v1107 = vmul.f32 %v1077, 0.5
    %v1108 = vmul.f32 %v1079, 0.5
    %v1109 = vmul.f32 %v1081, 0.5
    %v1110 = vmul.f32 %v1083, 0.5
    %v1111 = vmul.f32 %v1085, 0.5
    %v1112 = vmul.f32 %v1087, 0.5
    %v1113 = vmul.f32 %v1089, 0.5
    %v1114 = vmul.f32 %v1091, 0.5
    %v1115 = vmul.f32 %v1093, 0.5
    %v1116 = vmul.f32 %v1095, 0.5
    %v1117 = vmul.f32 %v1097, 0.5
    %v1118 = vmul.f32 %v1099, 0.5
    %v1119 = vmul.f32 %v1101, 0.5
    %v1120 = vmul.f32 %v1103, 0.5
    %v1121 = vmul.f32 %v1105, 0.5
    %v1122 = vadd.f32 %v947, 1.0
    %v1123 = vadd.f32 %v949, 1.0
    %v1124 = vadd.f32 %v951, 1.0
    %v1125 = vadd.f32 %v953, 1.0
    %v1126 = vadd.f32 %v955, 1.0
    %v1127 = vadd.f32 %v957, 1.0
    %v1128 = vadd.f32 %v959, 1.0
    %v1129 = vadd.f32 %v961, 1.0
    %v1130 = vadd.f32 %v963, 1.0
    %v1131 = vadd.f32 %v965, 1.0
    %v1132 = vadd.f32 %v967, 1.0
    %v1133 = vadd.f32 %v969, 1.0
    %v1134 = vadd.f32 %v971, 1.0
    %v1135 = vadd.f32 %v973, 1.0
    %v1136 = vadd.f32 %v975, 1.0
    %v1137 = vadd.f32 %v977, 1.0
    %v1138 = vlog2.pop %v1122
    %v1139 = vmul.f32 %v1138, 0.6931472
    %v1140 = vlog2.pop %v1123
    %v1141 = vmul.f32 %v1140, 0.6931472
    %v1142 = vlog2.pop %v1124
    %v1143 = vmul.f32 %v1142, 0.6931472
    %v1144 = vlog2.pop %v1125
    %v1145 = vmul.f32 %v1144, 0.6931472
    %v1146 = vlog2.pop %v1126
    %v1147 = vmul.f32 %v1146, 0.6931472
    %v1148 = vlog2.pop %v1127
    %v1149 = vmul.f32 %v1148, 0.6931472
    %v1150 = vlog2.pop %v1128
    %v1151 = vmul.f32 %v1150, 0.6931472
    %v1152 = vlog2.pop %v1129
    %v1153 = vmul.f32 %v1152, 0.6931472
    %v1154 = vlog2.pop %v1130
    %v1155 = vmul.f32 %v1154, 0.6931472
    %v1156 = vlog2.pop %v1131
    %v1157 = vmul.f32 %v1156, 0.6931472
    %v1158 = vlog2.pop %v1132
    %v1159 = vmul.f32 %v1158, 0.6931472
    %v1160 = vlog2.pop %v1133
    %v1161 = vmul.f32 %v1160, 0.6931472
    %v1162 = vlog2.pop %v1134
    %v1163 = vmul.f32 %v1162, 0.6931472
    %v1164 = vlog2.pop %v1135
    %v1165 = vmul.f32 %v1164, 0.6931472
    %v1166 = vlog2.pop %v1136
    %v1167 = vmul.f32 %v1166, 0.6931472
    %v1168 = vlog2.pop %v1137
    %v1169 = vmul.f32 %v1168, 0.6931472
    %v1170 = vmul.f32 %v1139, 0.025
    %v1171 = vmul.f32 %v1141, 0.025
    %v1172 = vmul.f32 %v1143, 0.025
    %v1173 = vmul.f32 %v1145, 0.025
    %v1174 = vmul.f32 %v1147, 0.025
    %v1175 = vmul.f32 %v1149, 0.025
    %v1176 = vmul.f32 %v1151, 0.025
    %v1177 = vmul.f32 %v1153, 0.025
    %v1178 = vmul.f32 %v1155, 0.025
    %v1179 = vmul.f32 %v1157, 0.025
    %v1180 = vmul.f32 %v1159, 0.025
    %v1181 = vmul.f32 %v1161, 0.025
    %v1182 = vmul.f32 %v1163, 0.025
    %v1183 = vmul.f32 %v1165, 0.025
    %v1184 = vmul.f32 %v1167, 0.025
    %v1185 = vmul.f32 %v1169, 0.025
    %v1186 = vadd.f32 %v1106, %v1170
    %v1187 = vadd.f32 %v1107, %v1171
    %v1188 = vadd.f32 %v1108, %v1172
    %v1189 = vadd.f32 %v1109, %v1173
    %v1190 = vadd.f32 %v1110, %v1174
    %v1191 = vadd.f32 %v1111, %v1175
    %v1192 = vadd.f32 %v1112, %v1176
    %v1193 = vadd.f32 %v1113, %v1177
    %v1194 = vadd.f32 %v1114, %v1178
    %v1195 = vadd.f32 %v1115, %v1179
    %v1196 = vadd.f32 %v1116, %v1180
    %v1197 = vadd.f32 %v1117, %v1181
    %v1198 = vadd.f32 %v1118, %v1182
    %v1199 = vadd.f32 %v1119, %v1183
    %v1200 = vadd.f32 %v1120, %v1184
    %v1201 = vadd.f32 %v1121, %v1185
    %v1202 = vsel %vm1042, %v1186, 0.0
    %v1203 = vsel %vm1043, %v1187, 0.0
    %v1204 = vsel %vm1044, %v1188, 0.0
    %v1205 = vsel %vm1045, %v1189, 0.0
    %v1206 = vsel %vm1046, %v1190, 0.0
    %v1207 = vsel %vm1047, %v1191, 0.0
    %v1208 = vsel %vm1048, %v1192, 0.0
    %v1209 = vsel %vm1049, %v1193, 0.0
    %v1210 = vsel %vm1050, %v1194, 0.0
    %v1211 = vsel %vm1051, %v1195, 0.0
    %v1212 = vsel %vm1052, %v1196, 0.0
    %v1213 = vsel %vm1053, %v1197, 0.0
    %v1214 = vsel %vm1054, %v1198, 0.0
    %v1215 = vsel %vm1055, %v1199, 0.0
    %v1216 = vsel %vm1056, %v1200, 0.0
    %v1217 = vsel %vm1057, %v1201, 0.0
    %vm1218 = vcmask 7168
    %v1219 = vsel %vm1218, %v1202, 0.0
    %v1220 = vsel %vm1218, %v1203, 0.0
    %v1221 = vadd.f32 %v1219, %v1220
    %v1222 = vsel %vm1218, %v1204, 0.0
    %v1223 = vadd.f32 %v1221, %v1222
    %v1224 = vsel %vm1218, %v1205, 0.0
    %v1225 = vadd.f32 %v1223, %v1224
    %v1226 = vsel %vm1218, %v1206, 0.0
    %v1227 = vadd.f32 %v1225, %v1226
    %v1228 = vsel %vm1218, %v1207, 0.0
    %v1229 = vadd.f32 %v1227, %v1228
    %v1230 = vsel %vm1218, %v1208, 0.0
    %v1231 = vadd.f32 %v1229, %v1230
    %v1232 = vsel %vm1218, %v1209, 0.0
    %v1233 = vadd.f32 %v1231, %v1232
    %v1234 = vsel %vm1218, %v1210, 0.0
    %v1235 = vadd.f32 %v1233, %v1234
    %v1236 = vsel %vm1218, %v1211, 0.0
    %v1237 = vadd.f32 %v1235, %v1236
    %v1238 = vsel %vm1218, %v1212, 0.0
    %v1239 = vadd.f32 %v1237, %v1238
    %v1240 = vsel %vm1218, %v1213, 0.0
    %v1241 = vadd.f32 %v1239, %v1240
    %v1242 = vsel %vm1218, %v1214, 0.0
    %v1243 = vadd.f32 %v1241, %v1242
    %v1244 = vsel %vm1218, %v1215, 0.0
    %v1245 = vadd.f32 %v1243, %v1244
    %v1246 = vsel %vm1218, %v1216, 0.0
    %v1247 = vadd.f32 %v1245, %v1246
    %v1248 = vsel %vm1218, %v1217, 0.0
    %v1249 = vadd.f32 %v1247, %v1248
    %1250 = vadd.xlane.f32.xlu0 %v1249
    %v1251 = vpop.xlane.xlu0 %1250
    %v1252 = vrot.slane %v1251, 4
    %v1253 = vadd.f32 %v1251, %v1252
    %v1254 = vrot.slane %v1253, 2
    %v1255 = vadd.f32 %v1253, %v1254
    %v1256 = vrot.slane %v1255, 1
    %v1257 = vadd.f32 %v1255, %v1256
    %s1258 = vtos %v1257
    %v1259 = vstv %s1258
    %1260 = vst [vmem:[#allocation2] sm:$0xff] %v1259
    // Predicated region
    $region18: #{tpu_custom_call.1} parent=1 // pred_check
      _
    $region19: #{tpu_custom_call.1} parent=1 // pred_check_branch
      %1262 = sbr.rel (0) target = $region21
    $region20: #{tpu_custom_call.1} parent=1 // pred_region
      %s1264 = ssub.s32 128, 128
      %1265 = vsyncadd [#allocation3], %s1264
      %s1267 = sshll.u32 [#allocation2], 4
      %s1268 = int_to_ptr.vmem [resolvable:$true] %s1267
      %1270 = dma.vmem_to_hbm [thread:$0]  %s1268, 128, %s4, [#allocation3]
    $region21: #{tpu_custom_call.1} parent=1 // pred_fallthru
      _
    // Predicated region
    $region22: #{tpu_custom_call.1} parent=1 // pred_check
      _
    $region23: #{tpu_custom_call.1} parent=1 // pred_check_branch
      %1272 = sbr.rel (0) target = $region25
    $region24: #{tpu_custom_call.1} parent=1 // pred_region
      %1273 = dma.done [#allocation3], 128
    $region25: #{tpu_custom_call.1} parent=1 // pred_fallthru
      _
    %1274 = vsyncpa [#allocation3], 1

</llo_original>
